<compile_context>
chip_gen: v7x
topology: tpu7x:2x2x1
jax: 0.10.0
libtpu: 0.0.40
codegen_flags: <defaults>
</compile_context>

<pallas_src>
import functools

import jax
import jax.numpy as jnp
from jax.experimental import pallas as pl
from jax.experimental.pallas import tpu as pltpu  # noqa: F401  (TPU backend)


# ---------------------------------------------------------------------------
# Fused kernel: BN1 -> relu(lin1 + GAT1) -> BN3 -> relu(lin3 + GAT3)
# ---------------------------------------------------------------------------
def _net_kernel(x_ref, adj_ref, vec_ref, w1_ref, w3_ref, o_ref, *,
                heads, fin, fp1, slot, fp3, eps=1e-5, slope=0.2):
    adj = adj_ref[...]                     # bf16 0/1 mask, applied lazily
    vec = vec_ref[...]                     # (8,128) packed gamma/beta/bias rows
    inv_n = 1.0 / x_ref.shape[0]

    def batchnorm(x, gamma, beta):
        # Single-pass statistics: var = E[x^2] - E[x]^2.
        mean = jnp.sum(x, axis=0, keepdims=True) * inv_n
        msq = jnp.sum(x * x, axis=0, keepdims=True) * inv_n
        var = msq - mean * mean
        return (x - mean) * jax.lax.rsqrt(var + eps) * gamma + beta

    def gat_block(x, w, blin, bgat, n_heads, slot_w, fout_pad):
        # One MXU matmul yields Linear branch, per-head slotted GAT projection
        # and the folded attention scores.
        proj = jnp.dot(x, w, preferred_element_type=jnp.float32)
        lin = proj[:, :fout_pad] + blin
        score_off = fout_pad + n_heads * slot_w
        scores = proj[:, score_off:score_off + 2 * n_heads]   # (N, 2H)
        scores_t = jnp.transpose(scores)                       # (2H, N)

        acc = None
        for hd in range(n_heads):                               # static unroll
            src_row = scores_t[hd:hd + 1, :]                    # (1, N)
            dst_col = scores[:, n_heads + hd:n_heads + hd + 1]  # (N, 1)
            # Row max from the packed scores (LeakyReLU monotone => exact).
            smax = jnp.max(src_row, axis=-1, keepdims=True)     # (1, 1)
            m = dst_col + smax
            m = jnp.maximum(m, slope * m)                       # LeakyReLU(0.2)
            e = dst_col + src_row
            e = jnp.maximum(e, slope * e)
            p = jnp.exp(e - m) * adj                            # masked, unnormalized
            rowsum = jnp.sum(p, axis=-1, keepdims=True)
            h_slot = proj[:, fout_pad + hd * slot_w:
                          fout_pad + (hd + 1) * slot_w]         # (N, slot_w)
            o = jnp.dot(p.astype(jnp.bfloat16), h_slot.astype(jnp.bfloat16),
                        preferred_element_type=jnp.float32)
            # Normalize after the matmul: (N,1) EUP reciprocal + (N,slot) mul.
            o = o * pl.reciprocal(rowsum, approx=True)
            acc = o if acc is None else acc + o                 # lane-disjoint add
        return jnp.maximum(lin + acc + bgat, 0.0)

    x = batchnorm(x_ref[...], vec[0:1, :fin], vec[1:2, :fin])
    x = gat_block(x, w1_ref[...], vec[2:3, :], vec[3:4, :], heads, slot, fp1)
    x = batchnorm(x, vec[4:5, :], vec[5:6, :])
    # Layer 2 (heads=1, out=2) computed in a lane-dense 128-wide padded layout;
    # padded lanes carry exact zeros and are sliced off at the JAX level.
    o_ref[...] = gat_block(x, w3_ref[...], vec[6:7, :], vec[7:8, :], 1, fp3, fp3)


def net_forward(x, adj, packed, *, heads, fp1, slot, fp3):
    N, fin = x.shape
    kernel = functools.partial(_net_kernel, heads=heads, fin=fin,
                               fp1=fp1, slot=slot, fp3=fp3)

    def full(shape):
        return pl.BlockSpec(shape, lambda: (0,) * len(shape))

    vecs, w1, w3 = packed["vecs"], packed["w1"], packed["w3"]
    out = pl.pallas_call(
        kernel,
        out_shape=jax.ShapeDtypeStruct((N, fp3), jnp.float32),
        in_specs=[
            full((N, fin)),       # x
            full((N, N)),         # adj (bf16 0/1 mask)
            full(vecs.shape),     # packed gamma/beta/bias rows (8,128)
            full(w1.shape),       # [lin1 | slotted gat1 | folded scores1]
            full(w3.shape),       # [lin3 | slotted gat3 | folded scores3]
        ],
        out_specs=full((N, fp3)),
    )(x, adj, vecs, w1, w3)
    return out[:, :2]             # drop lane padding -> (N, 2)


# ---------------------------------------------------------------------------
# Host-side parameter packing (done once, outside the kernel).
# ---------------------------------------------------------------------------
def _round_up(v, m):
    return ((v + m - 1) // m) * m


def pack_params(p, *, heads, hidden, fin, fp1, slot, fp3):
    fout1 = heads * hidden

    # --- Layer 1 weights: [ lin1 (fp1) | per-head slots (heads*slot) | scores (128) ]
    w1 = jnp.zeros((fin, fp1 + heads * slot + 128), jnp.float32)
    w1 = w1.at[:, :fout1].set(p["lin1_w"])
    so1 = fp1 + heads * slot
    for hd in range(heads):
        wg = p["gat1_w"][:, hd * hidden:(hd + 1) * hidden]
        base = fp1 + hd * slot + hd * hidden        # head hd at lanes hd*hidden of slot hd
        w1 = w1.at[:, base:base + hidden].set(wg)
        w1 = w1.at[:, so1 + hd].set(wg @ p["gat1_asrc"][hd])           # folded src score
        w1 = w1.at[:, so1 + heads + hd].set(wg @ p["gat1_adst"][hd])   # folded dst score

    # --- Layer 2 weights: [ lin3 (fp3) | gat slot (fp3) | scores (128) ]
    w3 = jnp.zeros((fout1, fp3 + fp3 + 128), jnp.float32)
    w3 = w3.at[:, :2].set(p["lin3_w"])
    w3 = w3.at[:, fp3:fp3 + 2].set(p["gat3_w"])
    so3 = 2 * fp3
    w3 = w3.at[:, so3 + 0].set(p["gat3_w"] @ p["gat3_asrc"][0])
    w3 = w3.at[:, so3 + 1].set(p["gat3_w"] @ p["gat3_adst"][0])

    # --- All (1,·) vectors coalesced into one (8,128) array (one DMA).
    vecs = jnp.zeros((8, 128), jnp.float32)
    vecs = vecs.at[0, :fin].set(p["bn1_gamma"])
    vecs = vecs.at[1, :fin].set(p["bn1_beta"])
    vecs = vecs.at[2, :fout1].set(p["lin1_b"])
    vecs = vecs.at[3, :fout1].set(p["gat1_b"])
    vecs = vecs.at[4, :fout1].set(p["bn3_gamma"])
    vecs = vecs.at[5, :fout1].set(p["bn3_beta"])
    vecs = vecs.at[6, :2].set(p["lin3_b"])
    vecs = vecs.at[7, :2].set(p["gat3_b"])

    return {"w1": w1, "w3": w3, "vecs": vecs}


def init_params(key, in_size, hidden, heads):
    fout = hidden * heads
    ks = jax.random.split(key, 8)
    s = 0.1
    return {
        "bn1_gamma": jnp.ones((in_size,), jnp.float32),
        "bn1_beta": jnp.zeros((in_size,), jnp.float32),
        "lin1_w": s * jax.random.normal(ks[0], (in_size, fout), jnp.float32),
        "lin1_b": jnp.zeros((fout,), jnp.float32),
        "gat1_w": s * jax.random.normal(ks[1], (in_size, fout), jnp.float32),
        "gat1_b": jnp.zeros((fout,), jnp.float32),
        "gat1_asrc": s * jax.random.normal(ks[2], (heads, hidden), jnp.float32),
        "gat1_adst": s * jax.random.normal(ks[3], (heads, hidden), jnp.float32),
        "bn3_gamma": jnp.ones((fout,), jnp.float32),
        "bn3_beta": jnp.zeros((fout,), jnp.float32),
        "lin3_w": s * jax.random.normal(ks[4], (fout, 2), jnp.float32),
        "lin3_b": jnp.zeros((2,), jnp.float32),
        "gat3_w": s * jax.random.normal(ks[5], (fout, 2), jnp.float32),
        "gat3_b": jnp.zeros((2,), jnp.float32),
        "gat3_asrc": s * jax.random.normal(ks[6], (1, 2), jnp.float32),
        "gat3_adst": s * jax.random.normal(ks[7], (1, 2), jnp.float32),
    }


# ---------------------------------------------------------------------------
# Pure-JAX reference (standard GATConv-style attention), for validation.
# ---------------------------------------------------------------------------
def reference_forward(x, adj, p, *, heads, hidden, eps=1e-5):
    def bn(x, g, b):
        m = x.mean(0, keepdims=True)
        v = ((x - m) ** 2).mean(0, keepdims=True)
        return (x - m) / jnp.sqrt(v + eps) * g + b

    def gat(x, w, b, asrc, adst, n_heads, c):
        h = jnp.dot(x, w, precision=jax.lax.Precision.HIGHEST)
        outs = []
        for hd in range(n_heads):
            hh = h[:, hd * c:(hd + 1) * c]
            s = hh @ asrc[hd]
            d = hh @ adst[hd]
            e = d[:, None] + s[None, :]
            e = jnp.where(e > 0, e, 0.2 * e)
            e = jnp.where(adj > 0, e, -1e9)
            a = jax.nn.softmax(e, axis=-1)
            outs.append(jnp.dot(a, hh, precision=jax.lax.Precision.HIGHEST))
        return jnp.concatenate(outs, axis=-1) + b

    x = bn(x, p["bn1_gamma"], p["bn1_beta"])
    x = jax.nn.relu(
        jnp.dot(x, p["lin1_w"], precision=jax.lax.Precision.HIGHEST)
        + p["lin1_b"]
        + gat(x, p["gat1_w"], p["gat1_b"], p["gat1_asrc"], p["gat1_adst"],
              heads, hidden))
    x = bn(x, p["bn3_gamma"], p["bn3_beta"])
    x = jax.nn.relu(
        jnp.dot(x, p["lin3_w"], precision=jax.lax.Precision.HIGHEST)
        + p["lin3_b"]
        + gat(x, p["gat3_w"], p["gat3_b"], p["gat3_asrc"], p["gat3_adst"],
              1, 2))
    return x


if __name__ == "__main__":
    N = 128         # number of graph nodes
    IN_SIZE = 16    # input feature size (data.x.size(1))
    HIDDEN = 64     # hidden_size (as in the spec)
    HEADS = 2       # attention heads  -> Fout1 = 128 (lane-dense)
    N_EDGES = 512

    FP1 = _round_up(HIDDEN * HEADS, 128)   # lin1 output lane padding
    SLOT = FP1                             # per-head 128-aligned slot width
    FP3 = 128                              # lane-dense padding for 2-wide layer

    key = jax.random.PRNGKey(0)
    kx, ke, kp = jax.random.split(key, 3)

    x = jax.random.normal(kx, (N, IN_SIZE), jnp.float32)

    # Random edge_index (2, E); densify: adj[dst, src] = 1, plus self-loops.
    edge_index = jax.random.randint(ke, (2, N_EDGES), 0, N, jnp.int32)
    adj = jnp.zeros((N, N), jnp.float32)
    adj = adj.at[edge_index[1], edge_index[0]].set(1.0)
    adj = jnp.maximum(adj, jnp.eye(N, dtype=jnp.float32))

    params = init_params(kp, IN_SIZE, HIDDEN, HEADS)
    packed = pack_params(params, heads=HEADS, hidden=HIDDEN, fin=IN_SIZE,
                         fp1=FP1, slot=SLOT, fp3=FP3)

    fwd = jax.jit(functools.partial(net_forward, heads=HEADS,
                                    fp1=FP1, slot=SLOT, fp3=FP3))
    out = fwd(x, adj.astype(jnp.bfloat16), packed)   # adj as bf16 0/1 mask
    jax.block_until_ready(out)

    assert out.shape == (N, 2) and out.dtype == jnp.float32

    ref = reference_forward(x, adj, params, heads=HEADS, hidden=HIDDEN)
    max_err = float(jnp.max(jnp.abs(out - ref)))
    # Tolerance covers the bf16 attention-value matmuls + approx reciprocal.
    assert max_err < 5e-2, f"mismatch vs reference: max abs err = {max_err}"

    print("KERNEL_OK")
</pallas_src>

<mosaic_0001>
module attributes {stable_mosaic.version = 11 : i64} {
  func.func @_net_kernel(%arg0: memref<128x16xf32, #tpu.memory_space<vmem>>, %arg1: memref<128x128xbf16, #tpu.memory_space<vmem>>, %arg2: memref<8x128xf32, #tpu.memory_space<vmem>>, %arg3: memref<16x512xf32, #tpu.memory_space<vmem>>, %arg4: memref<128x384xf32, #tpu.memory_space<vmem>>, %arg5: memref<128x128xf32, #tpu.memory_space<vmem>>) attributes {dimension_semantics = [], scalar_prefetch = 0 : i64, scratch_operands = 0 : i64, tpu.core_type = #tpu.core_type<tc>} {
    %c0 = arith.constant 0 : index
    %c0_0 = arith.constant 0 : index
    %0 = vector.load %arg1[%c0, %c0_0] : memref<128x128xbf16, #tpu.memory_space<vmem>>, vector<128x128xbf16>
    %c0_1 = arith.constant 0 : index
    %c0_2 = arith.constant 0 : index
    %1 = vector.load %arg2[%c0_1, %c0_2] : memref<8x128xf32, #tpu.memory_space<vmem>>, vector<8x128xf32>
    %c0_3 = arith.constant 0 : index
    %c0_4 = arith.constant 0 : index
    %2 = vector.load %arg0[%c0_3, %c0_4] : memref<128x16xf32, #tpu.memory_space<vmem>>, vector<128x16xf32>
    %3 = vector.extract_strided_slice %1 {offsets = [0, 0], sizes = [1, 16], strides = [1, 1]} : vector<8x128xf32> to vector<1x16xf32>
    %4 = vector.extract_strided_slice %1 {offsets = [1, 0], sizes = [1, 16], strides = [1, 1]} : vector<8x128xf32> to vector<1x16xf32>
    %cst = arith.constant dense<0.000000e+00> : vector<16xf32>
    %5 = vector.multi_reduction <add>, %2, %cst [0] : vector<128x16xf32> to vector<16xf32>
    %6 = vector.shape_cast %5 : vector<16xf32> to vector<1x16xf32>
    %cst_5 = arith.constant 7.812500e-03 : f32
    %7 = vector.broadcast %cst_5 : f32 to vector<1x16xf32>
    %8 = arith.mulf %6, %7 : vector<1x16xf32>
    %9 = arith.mulf %2, %2 : vector<128x16xf32>
    %cst_6 = arith.constant dense<0.000000e+00> : vector<16xf32>
    %10 = vector.multi_reduction <add>, %9, %cst_6 [0] : vector<128x16xf32> to vector<16xf32>
    %11 = vector.shape_cast %10 : vector<16xf32> to vector<1x16xf32>
    %cst_7 = arith.constant 7.812500e-03 : f32
    %12 = vector.broadcast %cst_7 : f32 to vector<1x16xf32>
    %13 = arith.mulf %11, %12 : vector<1x16xf32>
    %14 = arith.mulf %8, %8 : vector<1x16xf32>
    %15 = arith.subf %13, %14 : vector<1x16xf32>
    %16 = vector.broadcast %8 : vector<1x16xf32> to vector<128x16xf32>
    %17 = arith.subf %2, %16 : vector<128x16xf32>
    %cst_8 = arith.constant 9.99999974E-6 : f32
    %18 = vector.broadcast %cst_8 : f32 to vector<1x16xf32>
    %19 = arith.addf %15, %18 : vector<1x16xf32>
    %20 = math.rsqrt %19 : vector<1x16xf32>
    %21 = vector.broadcast %20 : vector<1x16xf32> to vector<128x16xf32>
    %22 = arith.mulf %17, %21 : vector<128x16xf32>
    %23 = vector.broadcast %3 : vector<1x16xf32> to vector<128x16xf32>
    %24 = arith.mulf %22, %23 : vector<128x16xf32>
    %25 = vector.broadcast %4 : vector<1x16xf32> to vector<128x16xf32>
    %26 = arith.addf %24, %25 : vector<128x16xf32>
    %c0_9 = arith.constant 0 : index
    %c0_10 = arith.constant 0 : index
    %27 = vector.load %arg3[%c0_9, %c0_10] : memref<16x512xf32, #tpu.memory_space<vmem>>, vector<16x512xf32>
    %28 = vector.extract_strided_slice %1 {offsets = [2, 0], sizes = [1, 128], strides = [1, 1]} : vector<8x128xf32> to vector<1x128xf32>
    %29 = vector.extract_strided_slice %1 {offsets = [3, 0], sizes = [1, 128], strides = [1, 1]} : vector<8x128xf32> to vector<1x128xf32>
    %cst_11 = arith.constant dense<0.000000e+00> : vector<128x512xf32>
    %30 = tpu.matmul %26, %27, %cst_11 {dimension_numbers = #tpu.dot_dimension_numbers<[1], [0], [0], [1], [0, 0, 1, 1], [], []>} : vector<128x16xf32>, vector<16x512xf32>, vector<128x512xf32> -> vector<128x512xf32>
    %31 = vector.extract_strided_slice %30 {offsets = [0, 0], sizes = [128, 128], strides = [1, 1]} : vector<128x512xf32> to vector<128x128xf32>
    %32 = vector.broadcast %28 : vector<1x128xf32> to vector<128x128xf32>
    %33 = arith.addf %31, %32 : vector<128x128xf32>
    %34 = vector.extract_strided_slice %30 {offsets = [0, 384], sizes = [128, 4], strides = [1, 1]} : vector<128x512xf32> to vector<128x4xf32>
    %35 = tpu.transpose %34, [1, 0] : vector<128x4xf32> -> vector<4x128xf32>
    %36 = vector.extract_strided_slice %35 {offsets = [0, 0], sizes = [1, 128], strides = [1, 1]} : vector<4x128xf32> to vector<1x128xf32>
    %37 = vector.extract_strided_slice %34 {offsets = [0, 2], sizes = [128, 1], strides = [1, 1]} : vector<128x4xf32> to vector<128x1xf32>
    %cst_12 = arith.constant dense<0xFF800000> : vector<1xf32>
    %38 = vector.multi_reduction <maximumf>, %36, %cst_12 [1] : vector<1x128xf32> to vector<1xf32>
    %39 = vector.shape_cast %38 : vector<1xf32> to vector<1x1xf32>
    %40 = vector.broadcast %39 : vector<1x1xf32> to vector<128x1xf32>
    %41 = arith.addf %37, %40 : vector<128x1xf32>
    %cst_13 = arith.constant 2.000000e-01 : f32
    %42 = vector.broadcast %cst_13 : f32 to vector<128x1xf32>
    %43 = arith.mulf %42, %41 : vector<128x1xf32>
    %44 = arith.maximumf %41, %43 : vector<128x1xf32>
    %45 = vector.broadcast %37 : vector<128x1xf32> to vector<128x128xf32>
    %46 = vector.broadcast %36 : vector<1x128xf32> to vector<128x128xf32>
    %47 = arith.addf %45, %46 : vector<128x128xf32>
    %cst_14 = arith.constant 2.000000e-01 : f32
    %48 = vector.broadcast %cst_14 : f32 to vector<128x128xf32>
    %49 = arith.mulf %48, %47 : vector<128x128xf32>
    %50 = arith.maximumf %47, %49 : vector<128x128xf32>
    %51 = vector.broadcast %44 : vector<128x1xf32> to vector<128x128xf32>
    %52 = arith.subf %50, %51 : vector<128x128xf32>
    %53 = math.exp %52 : vector<128x128xf32>
    %54 = arith.extf %0 : vector<128x128xbf16> to vector<128x128xf32>
    %55 = arith.mulf %53, %54 : vector<128x128xf32>
    %cst_15 = arith.constant dense<0.000000e+00> : vector<128xf32>
    %56 = vector.multi_reduction <add>, %55, %cst_15 [1] : vector<128x128xf32> to vector<128xf32>
    %57 = vector.shape_cast %56 : vector<128xf32> to vector<128x1xf32>
    %58 = vector.extract_strided_slice %30 {offsets = [0, 128], sizes = [128, 128], strides = [1, 1]} : vector<128x512xf32> to vector<128x128xf32>
    %59 = arith.truncf %55 : vector<128x128xf32> to vector<128x128xbf16>
    %60 = arith.truncf %58 : vector<128x128xf32> to vector<128x128xbf16>
    %cst_16 = arith.constant dense<0.000000e+00> : vector<128x128xf32>
    %61 = tpu.matmul %59, %60, %cst_16 {dimension_numbers = #tpu.dot_dimension_numbers<[1], [0], [0], [1], [0, 0, 1, 1], [], []>} : vector<128x128xbf16>, vector<128x128xbf16>, vector<128x128xf32> -> vector<128x128xf32>
    %62 = tpu.reciprocal %57 {approx = true} : vector<128x1xf32> -> vector<128x1xf32>
    %63 = vector.broadcast %62 : vector<128x1xf32> to vector<128x128xf32>
    %64 = arith.mulf %61, %63 : vector<128x128xf32>
    %65 = vector.extract_strided_slice %35 {offsets = [1, 0], sizes = [1, 128], strides = [1, 1]} : vector<4x128xf32> to vector<1x128xf32>
    %66 = vector.extract_strided_slice %34 {offsets = [0, 3], sizes = [128, 1], strides = [1, 1]} : vector<128x4xf32> to vector<128x1xf32>
    %cst_17 = arith.constant dense<0xFF800000> : vector<1xf32>
    %67 = vector.multi_reduction <maximumf>, %65, %cst_17 [1] : vector<1x128xf32> to vector<1xf32>
    %68 = vector.shape_cast %67 : vector<1xf32> to vector<1x1xf32>
    %69 = vector.broadcast %68 : vector<1x1xf32> to vector<128x1xf32>
    %70 = arith.addf %66, %69 : vector<128x1xf32>
    %cst_18 = arith.constant 2.000000e-01 : f32
    %71 = vector.broadcast %cst_18 : f32 to vector<128x1xf32>
    %72 = arith.mulf %71, %70 : vector<128x1xf32>
    %73 = arith.maximumf %70, %72 : vector<128x1xf32>
    %74 = vector.broadcast %66 : vector<128x1xf32> to vector<128x128xf32>
    %75 = vector.broadcast %65 : vector<1x128xf32> to vector<128x128xf32>
    %76 = arith.addf %74, %75 : vector<128x128xf32>
    %cst_19 = arith.constant 2.000000e-01 : f32
    %77 = vector.broadcast %cst_19 : f32 to vector<128x128xf32>
    %78 = arith.mulf %77, %76 : vector<128x128xf32>
    %79 = arith.maximumf %76, %78 : vector<128x128xf32>
    %80 = vector.broadcast %73 : vector<128x1xf32> to vector<128x128xf32>
    %81 = arith.subf %79, %80 : vector<128x128xf32>
    %82 = math.exp %81 : vector<128x128xf32>
    %83 = arith.extf %0 : vector<128x128xbf16> to vector<128x128xf32>
    %84 = arith.mulf %82, %83 : vector<128x128xf32>
    %cst_20 = arith.constant dense<0.000000e+00> : vector<128xf32>
    %85 = vector.multi_reduction <add>, %84, %cst_20 [1] : vector<128x128xf32> to vector<128xf32>
    %86 = vector.shape_cast %85 : vector<128xf32> to vector<128x1xf32>
    %87 = vector.extract_strided_slice %30 {offsets = [0, 256], sizes = [128, 128], strides = [1, 1]} : vector<128x512xf32> to vector<128x128xf32>
    %88 = arith.truncf %84 : vector<128x128xf32> to vector<128x128xbf16>
    %89 = arith.truncf %87 : vector<128x128xf32> to vector<128x128xbf16>
    %cst_21 = arith.constant dense<0.000000e+00> : vector<128x128xf32>
    %90 = tpu.matmul %88, %89, %cst_21 {dimension_numbers = #tpu.dot_dimension_numbers<[1], [0], [0], [1], [0, 0, 1, 1], [], []>} : vector<128x128xbf16>, vector<128x128xbf16>, vector<128x128xf32> -> vector<128x128xf32>
    %91 = tpu.reciprocal %86 {approx = true} : vector<128x1xf32> -> vector<128x1xf32>
    %92 = vector.broadcast %91 : vector<128x1xf32> to vector<128x128xf32>
    %93 = arith.mulf %90, %92 : vector<128x128xf32>
    %94 = arith.addf %64, %93 : vector<128x128xf32>
    %95 = arith.addf %33, %94 : vector<128x128xf32>
    %96 = vector.broadcast %29 : vector<1x128xf32> to vector<128x128xf32>
    %97 = arith.addf %95, %96 : vector<128x128xf32>
    %cst_22 = arith.constant 0.000000e+00 : f32
    %98 = vector.broadcast %cst_22 : f32 to vector<128x128xf32>
    %99 = arith.maximumf %97, %98 : vector<128x128xf32>
    %100 = vector.extract_strided_slice %1 {offsets = [4, 0], sizes = [1, 128], strides = [1, 1]} : vector<8x128xf32> to vector<1x128xf32>
    %101 = vector.extract_strided_slice %1 {offsets = [5, 0], sizes = [1, 128], strides = [1, 1]} : vector<8x128xf32> to vector<1x128xf32>
    %cst_23 = arith.constant dense<0.000000e+00> : vector<128xf32>
    %102 = vector.multi_reduction <add>, %99, %cst_23 [0] : vector<128x128xf32> to vector<128xf32>
    %103 = vector.shape_cast %102 : vector<128xf32> to vector<1x128xf32>
    %cst_24 = arith.constant 7.812500e-03 : f32
    %104 = vector.broadcast %cst_24 : f32 to vector<1x128xf32>
    %105 = arith.mulf %103, %104 : vector<1x128xf32>
    %106 = arith.mulf %99, %99 : vector<128x128xf32>
    %cst_25 = arith.constant dense<0.000000e+00> : vector<128xf32>
    %107 = vector.multi_reduction <add>, %106, %cst_25 [0] : vector<128x128xf32> to vector<128xf32>
    %108 = vector.shape_cast %107 : vector<128xf32> to vector<1x128xf32>
    %cst_26 = arith.constant 7.812500e-03 : f32
    %109 = vector.broadcast %cst_26 : f32 to vector<1x128xf32>
    %110 = arith.mulf %108, %109 : vector<1x128xf32>
    %111 = arith.mulf %105, %105 : vector<1x128xf32>
    %112 = arith.subf %110, %111 : vector<1x128xf32>
    %113 = vector.broadcast %105 : vector<1x128xf32> to vector<128x128xf32>
    %114 = arith.subf %99, %113 : vector<128x128xf32>
    %cst_27 = arith.constant 9.99999974E-6 : f32
    %115 = vector.broadcast %cst_27 : f32 to vector<1x128xf32>
    %116 = arith.addf %112, %115 : vector<1x128xf32>
    %117 = math.rsqrt %116 : vector<1x128xf32>
    %118 = vector.broadcast %117 : vector<1x128xf32> to vector<128x128xf32>
    %119 = arith.mulf %114, %118 : vector<128x128xf32>
    %120 = vector.broadcast %100 : vector<1x128xf32> to vector<128x128xf32>
    %121 = arith.mulf %119, %120 : vector<128x128xf32>
    %122 = vector.broadcast %101 : vector<1x128xf32> to vector<128x128xf32>
    %123 = arith.addf %121, %122 : vector<128x128xf32>
    %c0_28 = arith.constant 0 : index
    %c0_29 = arith.constant 0 : index
    %124 = vector.load %arg4[%c0_28, %c0_29] : memref<128x384xf32, #tpu.memory_space<vmem>>, vector<128x384xf32>
    %125 = vector.extract_strided_slice %1 {offsets = [6, 0], sizes = [1, 128], strides = [1, 1]} : vector<8x128xf32> to vector<1x128xf32>
    %126 = vector.extract_strided_slice %1 {offsets = [7, 0], sizes = [1, 128], strides = [1, 1]} : vector<8x128xf32> to vector<1x128xf32>
    %cst_30 = arith.constant dense<0.000000e+00> : vector<128x384xf32>
    %127 = tpu.matmul %123, %124, %cst_30 {dimension_numbers = #tpu.dot_dimension_numbers<[1], [0], [0], [1], [0, 0, 1, 1], [], []>} : vector<128x128xf32>, vector<128x384xf32>, vector<128x384xf32> -> vector<128x384xf32>
    %128 = vector.extract_strided_slice %127 {offsets = [0, 0], sizes = [128, 128], strides = [1, 1]} : vector<128x384xf32> to vector<128x128xf32>
    %129 = vector.broadcast %125 : vector<1x128xf32> to vector<128x128xf32>
    %130 = arith.addf %128, %129 : vector<128x128xf32>
    %131 = vector.extract_strided_slice %127 {offsets = [0, 256], sizes = [128, 2], strides = [1, 1]} : vector<128x384xf32> to vector<128x2xf32>
    %132 = tpu.transpose %131, [1, 0] : vector<128x2xf32> -> vector<2x128xf32>
    %133 = vector.extract_strided_slice %132 {offsets = [0, 0], sizes = [1, 128], strides = [1, 1]} : vector<2x128xf32> to vector<1x128xf32>
    %134 = vector.extract_strided_slice %131 {offsets = [0, 1], sizes = [128, 1], strides = [1, 1]} : vector<128x2xf32> to vector<128x1xf32>
    %cst_31 = arith.constant dense<0xFF800000> : vector<1xf32>
    %135 = vector.multi_reduction <maximumf>, %133, %cst_31 [1] : vector<1x128xf32> to vector<1xf32>
    %136 = vector.shape_cast %135 : vector<1xf32> to vector<1x1xf32>
    %137 = vector.broadcast %136 : vector<1x1xf32> to vector<128x1xf32>
    %138 = arith.addf %134, %137 : vector<128x1xf32>
    %cst_32 = arith.constant 2.000000e-01 : f32
    %139 = vector.broadcast %cst_32 : f32 to vector<128x1xf32>
    %140 = arith.mulf %139, %138 : vector<128x1xf32>
    %141 = arith.maximumf %138, %140 : vector<128x1xf32>
    %142 = vector.broadcast %134 : vector<128x1xf32> to vector<128x128xf32>
    %143 = vector.broadcast %133 : vector<1x128xf32> to vector<128x128xf32>
    %144 = arith.addf %142, %143 : vector<128x128xf32>
    %cst_33 = arith.constant 2.000000e-01 : f32
    %145 = vector.broadcast %cst_33 : f32 to vector<128x128xf32>
    %146 = arith.mulf %145, %144 : vector<128x128xf32>
    %147 = arith.maximumf %144, %146 : vector<128x128xf32>
    %148 = vector.broadcast %141 : vector<128x1xf32> to vector<128x128xf32>
    %149 = arith.subf %147, %148 : vector<128x128xf32>
    %150 = math.exp %149 : vector<128x128xf32>
    %151 = arith.extf %0 : vector<128x128xbf16> to vector<128x128xf32>
    %152 = arith.mulf %150, %151 : vector<128x128xf32>
    %cst_34 = arith.constant dense<0.000000e+00> : vector<128xf32>
    %153 = vector.multi_reduction <add>, %152, %cst_34 [1] : vector<128x128xf32> to vector<128xf32>
    %154 = vector.shape_cast %153 : vector<128xf32> to vector<128x1xf32>
    %155 = vector.extract_strided_slice %127 {offsets = [0, 128], sizes = [128, 128], strides = [1, 1]} : vector<128x384xf32> to vector<128x128xf32>
    %156 = arith.truncf %152 : vector<128x128xf32> to vector<128x128xbf16>
    %157 = arith.truncf %155 : vector<128x128xf32> to vector<128x128xbf16>
    %cst_35 = arith.constant dense<0.000000e+00> : vector<128x128xf32>
    %158 = tpu.matmul %156, %157, %cst_35 {dimension_numbers = #tpu.dot_dimension_numbers<[1], [0], [0], [1], [0, 0, 1, 1], [], []>} : vector<128x128xbf16>, vector<128x128xbf16>, vector<128x128xf32> -> vector<128x128xf32>
    %159 = tpu.reciprocal %154 {approx = true} : vector<128x1xf32> -> vector<128x1xf32>
    %160 = vector.broadcast %159 : vector<128x1xf32> to vector<128x128xf32>
    %161 = arith.mulf %158, %160 : vector<128x128xf32>
    %162 = arith.addf %130, %161 : vector<128x128xf32>
    %163 = vector.broadcast %126 : vector<1x128xf32> to vector<128x128xf32>
    %164 = arith.addf %162, %163 : vector<128x128xf32>
    %cst_36 = arith.constant 0.000000e+00 : f32
    %165 = vector.broadcast %cst_36 : f32 to vector<128x128xf32>
    %166 = arith.maximumf %164, %165 : vector<128x128xf32>
    %c0_37 = arith.constant 0 : index
    %c0_38 = arith.constant 0 : index
    %167 = vector.load %arg5[%c0_37, %c0_38] : memref<128x128xf32, #tpu.memory_space<vmem>>, vector<128x128xf32>
    tpu.vector_store %arg5[%c0_37, %c0_38], %166 {strides = array<i32>} : memref<128x128xf32, #tpu.memory_space<vmem>>, vector<128x128xf32>,
    return
  }
}

</mosaic_0001>

<llo_original>
// kernel: net_forward.1
$region0: #{net_forward.1}
  #allocation0 [shape = 'u32[]', space=smem, size = 0x4, offset = 0x4, fixed_abs, tag = 'smem constant byte address 0x4 - core index']
  #allocation1 [shape = 'u32[144,128]{1,0:T(1,128)}', space=vmem, size = 0x12000, scoped, tag = 'internal scratch']
  %s0 = inlined_call_operand.vmem [shape: f32[128,16], index: 0, kind: input, shape index: {}]
  %s1 = inlined_call_operand.vmem [shape: bf16[128,128], index: 1, kind: input, shape index: {}]
  %s2 = inlined_call_operand.vmem [shape: f32[8,128], index: 2, kind: input, shape index: {}]
  %s3 = inlined_call_operand.vmem [shape: f32[16,512], index: 3, kind: input, shape index: {}]
  %s4 = inlined_call_operand.hbm [shape: f32[128,384], index: 4, kind: input, shape index: {}]
  %s5 = inlined_call_operand.vmem [shape: f32[128,128], index: 5, kind: output, shape index: {}]
  %s6 = sld [smem:[#allocation0]]
  $region34: #{net_forward.1} parent=0
    _
  %s8 = ssub.s32 1, %s6
  %s9 = scalar_select 0, %s8, %s6
  $region1: #{net_forward.1} parent=0
    #allocation2 [shape = 'u8[196608]{0}', space=vmem, size = 0x30000, scoped, tag = 'input window, operand 4, single buffered']
    #allocation3 [shape = 's32[1]{0}', space=sflag, size = 0x4, scoped, tag = 'scoped memory for net_forward.1']
    %10 = vsyncpa [#allocation3], 0
    // Predicated region
    $region2: #{net_forward.1} parent=1 // pred_check
      _
    $region3: #{net_forward.1} parent=1 // pred_check_branch
      %12 = sbr.rel (0) target = $region5
    $region4: #{net_forward.1} parent=1 // pred_region
      _
    $region5: #{net_forward.1} parent=1 // pred_fallthru
      _
    // Predicated region
    $region6: #{net_forward.1} parent=1 // pred_check
      _
    $region7: #{net_forward.1} parent=1 // pred_check_branch
      %14 = sbr.rel (0) target = $region9
    $region8: #{net_forward.1} parent=1 // pred_region
      _
    $region9: #{net_forward.1} parent=1 // pred_fallthru
      _
    // Predicated region
    $region10: #{net_forward.1} parent=1 // pred_check
      _
    $region11: #{net_forward.1} parent=1 // pred_check_branch
      %16 = sbr.rel (0) target = $region13
    $region12: #{net_forward.1} parent=1 // pred_region
      _
    $region13: #{net_forward.1} parent=1 // pred_fallthru
      _
    // Predicated region
    $region14: #{net_forward.1} parent=1 // pred_check
      _
    $region15: #{net_forward.1} parent=1 // pred_check_branch
      %18 = sbr.rel (0) target = $region17
    $region16: #{net_forward.1} parent=1 // pred_region
      _
    $region17: #{net_forward.1} parent=1 // pred_fallthru
      _
    // Predicated region
    $region18: #{net_forward.1} parent=1 // pred_check
      _
    $region19: #{net_forward.1} parent=1 // pred_check_branch
      %20 = sbr.rel (0) target = $region21
    $region20: #{net_forward.1} parent=1 // pred_region
      %s22 = ssub.s32 6144, 6144
      %23 = vsyncadd [#allocation3], %s22
      %s24 = sshll.u32 [#allocation2], 4
      %s25 = int_to_ptr.vmem [resolvable:$true] %s24
      %30 = dma.hbm_to_vmem [thread:$0]  %s4, 6144, %s25, [#allocation3], 384, 384, 24
    $region21: #{net_forward.1} parent=1 // pred_fallthru
      _
    // Predicated region
    $region22: #{net_forward.1} parent=1 // pred_check
      _
    $region23: #{net_forward.1} parent=1 // pred_check_branch
      %32 = sbr.rel (0) target = $region25
    $region24: #{net_forward.1} parent=1 // pred_region
      %33 = dma.done [#allocation3], 6144
    $region25: #{net_forward.1} parent=1 // pred_fallthru
      _
    %v35 = vld [vmem:[%s1] sm:$0xf]
    %v36 = vld [vmem:[%s1 + $0x4] sm:$0xf]
    %v37 = vld [vmem:[%s1 + $0x8] sm:$0xf]
    %v38 = vld [vmem:[%s1 + $0xc] sm:$0xf]
    %v39 = vld [vmem:[%s1 + $0x10] sm:$0xf]
    %v40 = vld [vmem:[%s1 + $0x14] sm:$0xf]
    %v41 = vld [vmem:[%s1 + $0x18] sm:$0xf]
    %v42 = vld [vmem:[%s1 + $0x1c] sm:$0xf]
    %v43 = vld [vmem:[%s1 + $0x20] sm:$0xf]
    %v44 = vld [vmem:[%s1 + $0x24] sm:$0xf]
    %v45 = vld [vmem:[%s1 + $0x28] sm:$0xf]
    %v46 = vld [vmem:[%s1 + $0x2c] sm:$0xf]
    %v47 = vld [vmem:[%s1 + $0x30] sm:$0xf]
    %v48 = vld [vmem:[%s1 + $0x34] sm:$0xf]
    %v49 = vld [vmem:[%s1 + $0x38] sm:$0xf]
    %v50 = vld [vmem:[%s1 + $0x3c] sm:$0xf]
    %v51 = vld [vmem:[%s2] sm:$0xff]
    %v52 = vld [vmem:[%s0] sm:$0xff]
    %v53 = vld [vmem:[%s0 + $0x8] sm:$0xff]
    %v54 = vld [vmem:[%s0 + $0x10] sm:$0xff]
    %v55 = vld [vmem:[%s0 + $0x18] sm:$0xff]
    %v56 = vld [vmem:[%s0 + $0x20] sm:$0xff]
    %v57 = vld [vmem:[%s0 + $0x28] sm:$0xff]
    %v58 = vld [vmem:[%s0 + $0x30] sm:$0xff]
    %v59 = vld [vmem:[%s0 + $0x38] sm:$0xff]
    %v60 = vld [vmem:[%s0 + $0x40] sm:$0xff]
    %v61 = vld [vmem:[%s0 + $0x48] sm:$0xff]
    %v62 = vld [vmem:[%s0 + $0x50] sm:$0xff]
    %v63 = vld [vmem:[%s0 + $0x58] sm:$0xff]
    %v64 = vld [vmem:[%s0 + $0x60] sm:$0xff]
    %v65 = vld [vmem:[%s0 + $0x68] sm:$0xff]
    %v66 = vld [vmem:[%s0 + $0x70] sm:$0xff]
    %v67 = vld [vmem:[%s0 + $0x78] sm:$0xff]
    %vm68 = vcmask 130048
    %v69 = vsel %vm68, %v52, 0.0
    %v70 = vsel %vm68, %v53, 0.0
    %v71 = vadd.f32 %v69, %v70
    %v72 = vsel %vm68, %v54, 0.0
    %v73 = vadd.f32 %v71, %v72
    %v74 = vsel %vm68, %v55, 0.0
    %v75 = vadd.f32 %v73, %v74
    %v76 = vsel %vm68, %v56, 0.0
    %v77 = vadd.f32 %v75, %v76
    %v78 = vsel %vm68, %v57, 0.0
    %v79 = vadd.f32 %v77, %v78
    %v80 = vsel %vm68, %v58, 0.0
    %v81 = vadd.f32 %v79, %v80
    %v82 = vsel %vm68, %v59, 0.0
    %v83 = vadd.f32 %v81, %v82
    %v84 = vsel %vm68, %v60, 0.0
    %v85 = vadd.f32 %v83, %v84
    %v86 = vsel %vm68, %v61, 0.0
    %v87 = vadd.f32 %v85, %v86
    %v88 = vsel %vm68, %v62, 0.0
    %v89 = vadd.f32 %v87, %v88
    %v90 = vsel %vm68, %v63, 0.0
    %v91 = vadd.f32 %v89, %v90
    %v92 = vsel %vm68, %v64, 0.0
    %v93 = vadd.f32 %v91, %v92
    %v94 = vsel %vm68, %v65, 0.0
    %v95 = vadd.f32 %v93, %v94
    %v96 = vsel %vm68, %v66, 0.0
    %v97 = vadd.f32 %v95, %v96
    %v98 = vsel %vm68, %v67, 0.0
    %v99 = vadd.f32 %v97, %v98
    %v100 = vrot.slane %v99, 4
    %v101 = vadd.f32 %v99, %v100
    %v102 = vrot.slane %v101, 2
    %v103 = vadd.f32 %v101, %v102
    %v104 = vrot.slane %v103, 1
    %v105 = vadd.f32 %v103, %v104
    %v106 = vmul.f32 %v105, 0.0078125
    %v107 = vmul.f32 %v52, %v52
    %v108 = vmul.f32 %v53, %v53
    %v109 = vmul.f32 %v54, %v54
    %v110 = vmul.f32 %v55, %v55
    %v111 = vmul.f32 %v56, %v56
    %v112 = vmul.f32 %v57, %v57
    %v113 = vmul.f32 %v58, %v58
    %v114 = vmul.f32 %v59, %v59
    %v115 = vmul.f32 %v60, %v60
    %v116 = vmul.f32 %v61, %v61
    %v117 = vmul.f32 %v62, %v62
    %v118 = vmul.f32 %v63, %v63
    %v119 = vmul.f32 %v64, %v64
    %v120 = vmul.f32 %v65, %v65
    %v121 = vmul.f32 %v66, %v66
    %v122 = vmul.f32 %v67, %v67
    %v123 = vsel %vm68, %v107, 0.0
    %v124 = vsel %vm68, %v108, 0.0
    %v125 = vadd.f32 %v123, %v124
    %v126 = vsel %vm68, %v109, 0.0
    %v127 = vadd.f32 %v125, %v126
    %v128 = vsel %vm68, %v110, 0.0
    %v129 = vadd.f32 %v127, %v128
    %v130 = vsel %vm68, %v111, 0.0
    %v131 = vadd.f32 %v129, %v130
    %v132 = vsel %vm68, %v112, 0.0
    %v133 = vadd.f32 %v131, %v132
    %v134 = vsel %vm68, %v113, 0.0
    %v135 = vadd.f32 %v133, %v134
    %v136 = vsel %vm68, %v114, 0.0
    %v137 = vadd.f32 %v135, %v136
    %v138 = vsel %vm68, %v115, 0.0
    %v139 = vadd.f32 %v137, %v138
    %v140 = vsel %vm68, %v116, 0.0
    %v141 = vadd.f32 %v139, %v140
    %v142 = vsel %vm68, %v117, 0.0
    %v143 = vadd.f32 %v141, %v142
    %v144 = vsel %vm68, %v118, 0.0
    %v145 = vadd.f32 %v143, %v144
    %v146 = vsel %vm68, %v119, 0.0
    %v147 = vadd.f32 %v145, %v146
    %v148 = vsel %vm68, %v120, 0.0
    %v149 = vadd.f32 %v147, %v148
    %v150 = vsel %vm68, %v121, 0.0
    %v151 = vadd.f32 %v149, %v150
    %v152 = vsel %vm68, %v122, 0.0
    %v153 = vadd.f32 %v151, %v152
    %v154 = vrot.slane %v153, 4
    %v155 = vadd.f32 %v153, %v154
    %v156 = vrot.slane %v155, 2
    %v157 = vadd.f32 %v155, %v156
    %v158 = vrot.slane %v157, 1
    %v159 = vadd.f32 %v157, %v158
    %v160 = vmul.f32 %v159, 0.0078125
    %v161 = vmul.f32 %v106, %v106
    %v162 = vsub.f32 %v160, %v161
    %v163 = vsub.f32 %v52, %v106
    %v164 = vsub.f32 %v53, %v106
    %v165 = vsub.f32 %v54, %v106
    %v166 = vsub.f32 %v55, %v106
    %v167 = vsub.f32 %v56, %v106
    %v168 = vsub.f32 %v57, %v106
    %v169 = vsub.f32 %v58, %v106
    %v170 = vsub.f32 %v59, %v106
    %v171 = vsub.f32 %v60, %v106
    %v172 = vsub.f32 %v61, %v106
    %v173 = vsub.f32 %v62, %v106
    %v174 = vsub.f32 %v63, %v106
    %v175 = vsub.f32 %v64, %v106
    %v176 = vsub.f32 %v65, %v106
    %v177 = vsub.f32 %v66, %v106
    %v178 = vsub.f32 %v67, %v106
    %v179 = vadd.f32 %v162, 1e-05
    %v180 = vrsqrt.pop %v179
    %v181 = vmul.f32 %v163, %v180
    %v182 = vmul.f32 %v164, %v180
    %v183 = vmul.f32 %v165, %v180
    %v184 = vmul.f32 %v166, %v180
    %v185 = vmul.f32 %v167, %v180
    %v186 = vmul.f32 %v168, %v180
    %v187 = vmul.f32 %v169, %v180
    %v188 = vmul.f32 %v170, %v180
    %v189 = vmul.f32 %v171, %v180
    %v190 = vmul.f32 %v172, %v180
    %v191 = vmul.f32 %v173, %v180
    %v192 = vmul.f32 %v174, %v180
    %v193 = vmul.f32 %v175, %v180
    %v194 = vmul.f32 %v176, %v180
    %v195 = vmul.f32 %v177, %v180
    %v196 = vmul.f32 %v178, %v180
    %v197 = vlaneseq
    %v198 = vshrl.u32 %v197, 7
    %v199 = vsub.s32 0, %v198
    %v200 = vrot.slane %v51, %v199
    %v201 = vmul.f32 %v181, %v200
    %v202 = vmul.f32 %v182, %v200
    %v203 = vmul.f32 %v183, %v200
    %v204 = vmul.f32 %v184, %v200
    %v205 = vmul.f32 %v185, %v200
    %v206 = vmul.f32 %v186, %v200
    %v207 = vmul.f32 %v187, %v200
    %v208 = vmul.f32 %v188, %v200
    %v209 = vmul.f32 %v189, %v200
    %v210 = vmul.f32 %v190, %v200
    %v211 = vmul.f32 %v191, %v200
    %v212 = vmul.f32 %v192, %v200
    %v213 = vmul.f32 %v193, %v200
    %v214 = vmul.f32 %v194, %v200
    %v215 = vmul.f32 %v195, %v200
    %v216 = vmul.f32 %v196, %v200
    %v217 = vlaneseq
    %v218 = vshrl.u32 %v217, 7
    %v219 = vsub.s32 1, %v218
    %v220 = vrot.slane %v51, %v219
    %v221 = vadd.f32 %v201, %v220
    %v222 = vadd.f32 %v202, %v220
    %v223 = vadd.f32 %v203, %v220
    %v224 = vadd.f32 %v204, %v220
    %v225 = vadd.f32 %v205, %v220
    %v226 = vadd.f32 %v206, %v220
    %v227 = vadd.f32 %v207, %v220
    %v228 = vadd.f32 %v208, %v220
    %v229 = vadd.f32 %v209, %v220
    %v230 = vadd.f32 %v210, %v220
    %v231 = vadd.f32 %v211, %v220
    %v232 = vadd.f32 %v212, %v220
    %v233 = vadd.f32 %v213, %v220
    %v234 = vadd.f32 %v214, %v220
    %v235 = vadd.f32 %v215, %v220
    %v236 = vadd.f32 %v216, %v220
    %v237 = vld [vmem:[%s3] sm:$0xff]
    %v238 = vld [vmem:[%s3 + $0x8] sm:$0xff]
    %v239 = vld [vmem:[%s3 + $0x10] sm:$0xff]
    %v240 = vld [vmem:[%s3 + $0x18] sm:$0xff]
    %v241 = vld [vmem:[%s3 + $0x20] sm:$0xff]
    %v242 = vld [vmem:[%s3 + $0x28] sm:$0xff]
    %v243 = vld [vmem:[%s3 + $0x30] sm:$0xff]
    %v244 = vld [vmem:[%s3 + $0x38] sm:$0xff]
    %v246 = vsel %vm68, %v221, 0
    %v249 = vsel %vm68, %v222, 0
    %v252 = vsel %vm68, %v223, 0
    %v255 = vsel %vm68, %v224, 0
    %v258 = vsel %vm68, %v225, 0
    %v261 = vsel %vm68, %v226, 0
    %v264 = vsel %vm68, %v227, 0
    %v267 = vsel %vm68, %v228, 0
    %v270 = vsel %vm68, %v229, 0
    %v273 = vsel %vm68, %v230, 0
    %v276 = vsel %vm68, %v231, 0
    %v279 = vsel %vm68, %v232, 0
    %v282 = vsel %vm68, %v233, 0
    %v285 = vsel %vm68, %v234, 0
    %v288 = vsel %vm68, %v235, 0
    %v291 = vsel %vm68, %v236, 0
    %293 = vmatprep.subr.mxu0 %v238
    %294 = vmatpush1.msra.mxu0 %v237
    %295 = vmatprep.subr.mxu0 %v242
    %296 = vmatpush1.msra.mxu0 %v241
    %297 = vmatprep.subr.mxu0 0.0
    %298 = vmatpush1.msra.mxu0 0.0
    %299 = vmatprep.subr.mxu0 0.0
    %300 = vmatpush1.msra.mxu0 0.0
    %301 = vmatprep.subr.mxu0 0.0
    %302 = vmatpush1.msra.mxu0 0.0
    %303 = vmatprep.subr.mxu0 0.0
    %304 = vmatpush1.msra.mxu0 0.0
    %305 = vmatprep.subr.mxu0 0.0
    %306 = vmatpush1.msra.mxu0 0.0
    %307 = vmatprep.subr.mxu0 0.0
    %308 = vmatpush1.msra.mxu0 0.0
    %309 = vmatprep.subr.mxu0 0.0
    %310 = vmatpush1.msra.mxu0 0.0
    %311 = vmatprep.subr.mxu0 0.0
    %312 = vmatpush1.msra.mxu0 0.0
    %313 = vmatprep.subr.mxu0 0.0
    %314 = vmatpush1.msra.mxu0 0.0
    %315 = vmatprep.subr.mxu0 0.0
    %316 = vmatpush1.msra.mxu0 0.0
    %317 = vmatprep.subr.mxu0 0.0
    %318 = vmatpush1.msra.mxu0 0.0
    %319 = vmatprep.subr.mxu0 0.0
    %320 = vmatpush1.msra.mxu0 0.0
    %321 = vmatprep.subr.mxu0 0.0
    %322 = vmatpush1.msra.mxu0 0.0
    %323 = vmatprep.subr.mxu0 0.0
    %324 = vmatpush1.msra.mxu0 0.0
    %325 = vmatprep.subr.mxu0 0.0
    %326 = vmatpush1.msra.mxu0 0.0
    %327 = vmatprep.subr.mxu0 0.0
    %328 = vmatpush1.msra.mxu0 0.0
    %329 = vmatprep.subr.mxu0 0.0
    %330 = vmatpush1.msra.mxu0 0.0
    %331 = vmatprep.subr.mxu0 0.0
    %332 = vmatpush1.msra.mxu0 0.0
    %333 = vmatprep.subr.mxu0 0.0
    %334 = vmatpush1.msra.mxu0 0.0
    %335 = vmatprep.subr.mxu0 0.0
    %336 = vmatpush1.msra.mxu0 0.0
    %337 = vmatprep.subr.mxu0 0.0
    %338 = vmatpush1.msra.mxu0 0.0
    %339 = vmatprep.subr.mxu0 0.0
    %340 = vmatpush1.msra.mxu0 0.0
    %341 = vmatprep.subr.mxu0 0.0
    %342 = vmatpush1.msra.mxu0 0.0
    %343 = vmatprep.subr.mxu0 0.0
    %344 = vmatpush1.msra.mxu0 0.0
    %345 = vmatprep.subr.mxu0 0.0
    %346 = vmatpush1.msra.mxu0 0.0
    %347 = vmatprep.subr.mxu0 0.0
    %348 = vmatpush1.msra.mxu0 0.0
    %349 = vmatprep.subr.mxu0 0.0
    %350 = vmatpush1.msra.mxu0 0.0
    %351 = vmatprep.subr.mxu0 0.0
    %352 = vmatpush1.msra.mxu0 0.0
    %353 = vmatprep.subr.mxu0 0.0
    %354 = vmatpush1.msra.mxu0 0.0
    %355 = vmatprep.subr.mxu0 0.0
    %356 = vmatpush1.msra.mxu0 0.0
    %357 = vmatprep.mubr.f32.mxu0 0.0
    %358 = vmatmul.mubr.f32.gmra.mrb[0].mxu0 %v246
    %v359 = vpop.f32.mrb[0].mxu0
    %v360 = vadd.f32 0.0, %v359
    %v361 = vpop.f32.mrb[0].mxu0
    %v362 = vadd.f32 0.0, %v361
    %363 = vmatprep.mubr.f32.mxu0 0.0
    %364 = vmatmul.mubr.f32.gmra.mrb[0].mxu0 %v249
    %v365 = vpop.f32.mrb[0].mxu0
    %v366 = vadd.f32 0.0, %v365
    %v367 = vpop.f32.mrb[0].mxu0
    %v368 = vadd.f32 0.0, %v367
    %369 = vmatprep.mubr.f32.mxu0 0.0
    %370 = vmatmul.mubr.f32.gmra.mrb[0].mxu0 %v252
    %v371 = vpop.f32.mrb[0].mxu0
    %v372 = vadd.f32 0.0, %v371
    %v373 = vpop.f32.mrb[0].mxu0
    %v374 = vadd.f32 0.0, %v373
    %375 = vmatprep.mubr.f32.mxu0 0.0
    %376 = vmatmul.mubr.f32.gmra.mrb[0].mxu0 %v255
    %v377 = vpop.f32.mrb[0].mxu0
    %v378 = vadd.f32 0.0, %v377
    %v379 = vpop.f32.mrb[0].mxu0
    %v380 = vadd.f32 0.0, %v379
    %381 = vmatprep.mubr.f32.mxu0 0.0
    %382 = vmatmul.mubr.f32.gmra.mrb[0].mxu0 %v258
    %v383 = vpop.f32.mrb[0].mxu0
    %v384 = vadd.f32 0.0, %v383
    %v385 = vpop.f32.mrb[0].mxu0
    %v386 = vadd.f32 0.0, %v385
    %387 = vmatprep.mubr.f32.mxu0 0.0
    %388 = vmatmul.mubr.f32.gmra.mrb[0].mxu0 %v261
    %v389 = vpop.f32.mrb[0].mxu0
    %v390 = vadd.f32 0.0, %v389
    %v391 = vpop.f32.mrb[0].mxu0
    %v392 = vadd.f32 0.0, %v391
    %393 = vmatprep.mubr.f32.mxu0 0.0
    %394 = vmatmul.mubr.f32.gmra.mrb[0].mxu0 %v264
    %v395 = vpop.f32.mrb[0].mxu0
    %v396 = vadd.f32 0.0, %v395
    %v397 = vpop.f32.mrb[0].mxu0
    %v398 = vadd.f32 0.0, %v397
    %399 = vmatprep.mubr.f32.mxu0 0.0
    %400 = vmatmul.mubr.f32.gmra.mrb[0].mxu0 %v267
    %v401 = vpop.f32.mrb[0].mxu0
    %v402 = vadd.f32 0.0, %v401
    %v403 = vpop.f32.mrb[0].mxu0
    %v404 = vadd.f32 0.0, %v403
    %405 = vmatprep.mubr.f32.mxu0 0.0
    %406 = vmatmul.mubr.f32.gmra.mrb[0].mxu0 %v270
    %v407 = vpop.f32.mrb[0].mxu0
    %v408 = vadd.f32 0.0, %v407
    %v409 = vpop.f32.mrb[0].mxu0
    %v410 = vadd.f32 0.0, %v409
    %411 = vmatprep.mubr.f32.mxu0 0.0
    %412 = vmatmul.mubr.f32.gmra.mrb[0].mxu0 %v273
    %v413 = vpop.f32.mrb[0].mxu0
    %v414 = vadd.f32 0.0, %v413
    %v415 = vpop.f32.mrb[0].mxu0
    %v416 = vadd.f32 0.0, %v415
    %417 = vmatprep.mubr.f32.mxu0 0.0
    %418 = vmatmul.mubr.f32.gmra.mrb[0].mxu0 %v276
    %v419 = vpop.f32.mrb[0].mxu0
    %v420 = vadd.f32 0.0, %v419
    %v421 = vpop.f32.mrb[0].mxu0
    %v422 = vadd.f32 0.0, %v421
    %423 = vmatprep.mubr.f32.mxu0 0.0
    %424 = vmatmul.mubr.f32.gmra.mrb[0].mxu0 %v279
    %v425 = vpop.f32.mrb[0].mxu0
    %v426 = vadd.f32 0.0, %v425
    %v427 = vpop.f32.mrb[0].mxu0
    %v428 = vadd.f32 0.0, %v427
    %429 = vmatprep.mubr.f32.mxu0 0.0
    %430 = vmatmul.mubr.f32.gmra.mrb[0].mxu0 %v282
    %v431 = vpop.f32.mrb[0].mxu0
    %v432 = vadd.f32 0.0, %v431
    %v433 = vpop.f32.mrb[0].mxu0
    %v434 = vadd.f32 0.0, %v433
    %435 = vmatprep.mubr.f32.mxu0 0.0
    %436 = vmatmul.mubr.f32.gmra.mrb[0].mxu0 %v285
    %v437 = vpop.f32.mrb[0].mxu0
    %v438 = vadd.f32 0.0, %v437
    %v439 = vpop.f32.mrb[0].mxu0
    %v440 = vadd.f32 0.0, %v439
    %441 = vmatprep.mubr.f32.mxu0 0.0
    %442 = vmatmul.mubr.f32.gmra.mrb[0].mxu0 %v288
    %v443 = vpop.f32.mrb[0].mxu0
    %v444 = vadd.f32 0.0, %v443
    %v445 = vpop.f32.mrb[0].mxu0
    %v446 = vadd.f32 0.0, %v445
    %447 = vmatprep.mubr.f32.mxu0 0.0
    %448 = vmatmul.mubr.f32.gmra.mrb[0].mxu0 %v291
    %v449 = vpop.f32.mrb[0].mxu0
    %v450 = vadd.f32 0.0, %v449
    %v451 = vpop.f32.mrb[0].mxu0
    %v452 = vadd.f32 0.0, %v451
    %453 = vdwg.mxu0
    %454 = vmatprep.subr.mxu0 %v240
    %455 = vmatpush1.msra.mxu0 %v239
    %456 = vmatprep.subr.mxu0 %v244
    %457 = vmatpush1.msra.mxu0 %v243
    %458 = vmatprep.subr.mxu0 0.0
    %459 = vmatpush1.msra.mxu0 0.0
    %460 = vmatprep.subr.mxu0 0.0
    %461 = vmatpush1.msra.mxu0 0.0
    %462 = vmatprep.subr.mxu0 0.0
    %463 = vmatpush1.msra.mxu0 0.0
    %464 = vmatprep.subr.mxu0 0.0
    %465 = vmatpush1.msra.mxu0 0.0
    %466 = vmatprep.subr.mxu0 0.0
    %467 = vmatpush1.msra.mxu0 0.0
    %468 = vmatprep.subr.mxu0 0.0
    %469 = vmatpush1.msra.mxu0 0.0
    %470 = vmatprep.subr.mxu0 0.0
    %471 = vmatpush1.msra.mxu0 0.0
    %472 = vmatprep.subr.mxu0 0.0
    %473 = vmatpush1.msra.mxu0 0.0
    %474 = vmatprep.subr.mxu0 0.0
    %475 = vmatpush1.msra.mxu0 0.0
    %476 = vmatprep.subr.mxu0 0.0
    %477 = vmatpush1.msra.mxu0 0.0
    %478 = vmatprep.subr.mxu0 0.0
    %479 = vmatpush1.msra.mxu0 0.0
    %480 = vmatprep.subr.mxu0 0.0
    %481 = vmatpush1.msra.mxu0 0.0
    %482 = vmatprep.subr.mxu0 0.0
    %483 = vmatpush1.msra.mxu0 0.0
    %484 = vmatprep.subr.mxu0 0.0
    %485 = vmatpush1.msra.mxu0 0.0
    %486 = vmatprep.subr.mxu0 0.0
    %487 = vmatpush1.msra.mxu0 0.0
    %488 = vmatprep.subr.mxu0 0.0
    %489 = vmatpush1.msra.mxu0 0.0
    %490 = vmatprep.subr.mxu0 0.0
    %491 = vmatpush1.msra.mxu0 0.0
    %492 = vmatprep.subr.mxu0 0.0
    %493 = vmatpush1.msra.mxu0 0.0
    %494 = vmatprep.subr.mxu0 0.0
    %495 = vmatpush1.msra.mxu0 0.0
    %496 = vmatprep.subr.mxu0 0.0
    %497 = vmatpush1.msra.mxu0 0.0
    %498 = vmatprep.subr.mxu0 0.0
    %499 = vmatpush1.msra.mxu0 0.0
    %500 = vmatprep.subr.mxu0 0.0
    %501 = vmatpush1.msra.mxu0 0.0
    %502 = vmatprep.subr.mxu0 0.0
    %503 = vmatpush1.msra.mxu0 0.0
    %504 = vmatprep.subr.mxu0 0.0
    %505 = vmatpush1.msra.mxu0 0.0
    %506 = vmatprep.subr.mxu0 0.0
    %507 = vmatpush1.msra.mxu0 0.0
    %508 = vmatprep.subr.mxu0 0.0
    %509 = vmatpush1.msra.mxu0 0.0
    %510 = vmatprep.subr.mxu0 0.0
    %511 = vmatpush1.msra.mxu0 0.0
    %512 = vmatprep.subr.mxu0 0.0
    %513 = vmatpush1.msra.mxu0 0.0
    %514 = vmatprep.subr.mxu0 0.0
    %515 = vmatpush1.msra.mxu0 0.0
    %516 = vmatprep.subr.mxu0 0.0
    %517 = vmatpush1.msra.mxu0 0.0
    %518 = vmatprep.mubr.f32.mxu0 0.0
    %519 = vmatmul.mubr.f32.gmra.mrb[0].mxu0 %v246
    %v520 = vpop.f32.mrb[0].mxu0
    %v521 = vadd.f32 0.0, %v520
    %v522 = vpop.f32.mrb[0].mxu0
    %v523 = vadd.f32 0.0, %v522
    %524 = vmatprep.mubr.f32.mxu0 0.0
    %525 = vmatmul.mubr.f32.gmra.mrb[0].mxu0 %v249
    %v526 = vpop.f32.mrb[0].mxu0
    %v527 = vadd.f32 0.0, %v526
    %v528 = vpop.f32.mrb[0].mxu0
    %v529 = vadd.f32 0.0, %v528
    %530 = vmatprep.mubr.f32.mxu0 0.0
    %531 = vmatmul.mubr.f32.gmra.mrb[0].mxu0 %v252
    %v532 = vpop.f32.mrb[0].mxu0
    %v533 = vadd.f32 0.0, %v532
    %v534 = vpop.f32.mrb[0].mxu0
    %v535 = vadd.f32 0.0, %v534
    %536 = vmatprep.mubr.f32.mxu0 0.0
    %537 = vmatmul.mubr.f32.gmra.mrb[0].mxu0 %v255
    %v538 = vpop.f32.mrb[0].mxu0
    %v539 = vadd.f32 0.0, %v538
    %v540 = vpop.f32.mrb[0].mxu0
    %v541 = vadd.f32 0.0, %v540
    %542 = vmatprep.mubr.f32.mxu0 0.0
    %543 = vmatmul.mubr.f32.gmra.mrb[0].mxu0 %v258
    %v544 = vpop.f32.mrb[0].mxu0
    %v545 = vadd.f32 0.0, %v544
    %v546 = vpop.f32.mrb[0].mxu0
    %v547 = vadd.f32 0.0, %v546
    %548 = vmatprep.mubr.f32.mxu0 0.0
    %549 = vmatmul.mubr.f32.gmra.mrb[0].mxu0 %v261
    %v550 = vpop.f32.mrb[0].mxu0
    %v551 = vadd.f32 0.0, %v550
    %v552 = vpop.f32.mrb[0].mxu0
    %v553 = vadd.f32 0.0, %v552
    %554 = vmatprep.mubr.f32.mxu0 0.0
    %555 = vmatmul.mubr.f32.gmra.mrb[0].mxu0 %v264
    %v556 = vpop.f32.mrb[0].mxu0
    %v557 = vadd.f32 0.0, %v556
    %v558 = vpop.f32.mrb[0].mxu0
    %v559 = vadd.f32 0.0, %v558
    %560 = vmatprep.mubr.f32.mxu0 0.0
    %561 = vmatmul.mubr.f32.gmra.mrb[0].mxu0 %v267
    %v562 = vpop.f32.mrb[0].mxu0
    %v563 = vadd.f32 0.0, %v562
    %v564 = vpop.f32.mrb[0].mxu0
    %v565 = vadd.f32 0.0, %v564
    %566 = vmatprep.mubr.f32.mxu0 0.0
    %567 = vmatmul.mubr.f32.gmra.mrb[0].mxu0 %v270
    %v568 = vpop.f32.mrb[0].mxu0
    %v569 = vadd.f32 0.0, %v568
    %v570 = vpop.f32.mrb[0].mxu0
    %v571 = vadd.f32 0.0, %v570
    %572 = vmatprep.mubr.f32.mxu0 0.0
    %573 = vmatmul.mubr.f32.gmra.mrb[0].mxu0 %v273
    %v574 = vpop.f32.mrb[0].mxu0
    %v575 = vadd.f32 0.0, %v574
    %v576 = vpop.f32.mrb[0].mxu0
    %v577 = vadd.f32 0.0, %v576
    %578 = vmatprep.mubr.f32.mxu0 0.0
    %579 = vmatmul.mubr.f32.gmra.mrb[0].mxu0 %v276
    %v580 = vpop.f32.mrb[0].mxu0
    %v581 = vadd.f32 0.0, %v580
    %v582 = vpop.f32.mrb[0].mxu0
    %v583 = vadd.f32 0.0, %v582
    %584 = vmatprep.mubr.f32.mxu0 0.0
    %585 = vmatmul.mubr.f32.gmra.mrb[0].mxu0 %v279
    %v586 = vpop.f32.mrb[0].mxu0
    %v587 = vadd.f32 0.0, %v586
    %v588 = vpop.f32.mrb[0].mxu0
    %v589 = vadd.f32 0.0, %v588
    %590 = vmatprep.mubr.f32.mxu0 0.0
    %591 = vmatmul.mubr.f32.gmra.mrb[0].mxu0 %v282
    %v592 = vpop.f32.mrb[0].mxu0
    %v593 = vadd.f32 0.0, %v592
    %v594 = vpop.f32.mrb[0].mxu0
    %v595 = vadd.f32 0.0, %v594
    %596 = vmatprep.mubr.f32.mxu0 0.0
    %597 = vmatmul.mubr.f32.gmra.mrb[0].mxu0 %v285
    %v598 = vpop.f32.mrb[0].mxu0
    %v599 = vadd.f32 0.0, %v598
    %v600 = vpop.f32.mrb[0].mxu0
    %v601 = vadd.f32 0.0, %v600
    %602 = vmatprep.mubr.f32.mxu0 0.0
    %603 = vmatmul.mubr.f32.gmra.mrb[0].mxu0 %v288
    %v604 = vpop.f32.mrb[0].mxu0
    %v605 = vadd.f32 0.0, %v604
    %v606 = vpop.f32.mrb[0].mxu0
    %v607 = vadd.f32 0.0, %v606
    %608 = vmatprep.mubr.f32.mxu0 0.0
    %609 = vmatmul.mubr.f32.gmra.mrb[0].mxu0 %v291
    %v610 = vpop.f32.mrb[0].mxu0
    %v611 = vadd.f32 0.0, %v610
    %v612 = vpop.f32.mrb[0].mxu0
    %v613 = vadd.f32 0.0, %v612
    %614 = vdwg.mxu0
    %v615 = vlaneseq
    %v616 = vshrl.u32 %v615, 7
    %v617 = vsub.s32 2, %v616
    %v618 = vrot.slane %v51, %v617
    %v619 = vadd.f32 %v360, %v618
    %v620 = vadd.f32 %v366, %v618
    %v621 = vadd.f32 %v372, %v618
    %v622 = vadd.f32 %v378, %v618
    %v623 = vadd.f32 %v384, %v618
    %v624 = vadd.f32 %v390, %v618
    %v625 = vadd.f32 %v396, %v618
    %v626 = vadd.f32 %v402, %v618
    %v627 = vadd.f32 %v408, %v618
    %v628 = vadd.f32 %v414, %v618
    %v629 = vadd.f32 %v420, %v618
    %v630 = vadd.f32 %v426, %v618
    %v631 = vadd.f32 %v432, %v618
    %v632 = vadd.f32 %v438, %v618
    %v633 = vadd.f32 %v444, %v618
    %v634 = vadd.f32 %v450, %v618
    %635 = vxpose.xlu0.b32.start [1/16] %v523, 128
    %636 = vxpose.xlu0.b32.cont [2/16] %v529, 128
    %637 = vxpose.xlu0.b32.cont [3/16] %v535, 128
    %638 = vxpose.xlu0.b32.cont [4/16] %v541, 128
    %639 = vxpose.xlu0.b32.cont [5/16] %v547, 128
    %640 = vxpose.xlu0.b32.cont [6/16] %v553, 128
    %641 = vxpose.xlu0.b32.cont [7/16] %v559, 128
    %642 = vxpose.xlu0.b32.cont [8/16] %v565, 128
    %643 = vxpose.xlu0.b32.cont [9/16] %v571, 128
    %644 = vxpose.xlu0.b32.cont [10/16] %v577, 128
    %645 = vxpose.xlu0.b32.cont [11/16] %v583, 128
    %646 = vxpose.xlu0.b32.cont [12/16] %v589, 128
    %647 = vxpose.xlu0.b32.cont [13/16] %v595, 128
    %648 = vxpose.xlu0.b32.cont [14/16] %v601, 128
    %649 = vxpose.xlu0.b32.cont [15/16] %v607, 128
    %650 = vxpose.xlu0.b32.end [16/16] %v613, 128
    %v651 = vpop.trf.xlu0
    %v652 = vpop.trf.xlu0
    %v653 = vpop.trf.xlu0
    %v654 = vpop.trf.xlu0
    %v655 = vpop.trf.xlu0
    %v656 = vpop.trf.xlu0
    %v657 = vpop.trf.xlu0
    %v658 = vpop.trf.xlu0
    %v659 = vpop.trf.xlu0
    %v660 = vpop.trf.xlu0
    %v661 = vpop.trf.xlu0
    %v662 = vpop.trf.xlu0
    %v663 = vpop.trf.xlu0
    %v664 = vpop.trf.xlu0
    %v665 = vpop.trf.xlu0
    %v666 = vpop.trf.xlu0
    %vm667 = vcmask 1040384
    %v668 = vsel %vm667, %v651, -inf
    %669 = vmax.xlane.f32.xlu0 %v668
    %v670 = vpop.xlane.xlu0 %669
    %v671 = vlaneseq
    %v672 = vshrl.u32 %v671, 7
    %v673 = vsub.s32 0, %v672
    %v674 = vrot.slane %v670, %v673
    %v675 = vadd.f32 %v523, %v674
    %v676 = vadd.f32 %v529, %v674
    %v677 = vadd.f32 %v535, %v674
    %v678 = vadd.f32 %v541, %v674
    %v679 = vadd.f32 %v547, %v674
    %v680 = vadd.f32 %v553, %v674
    %v681 = vadd.f32 %v559, %v674
    %v682 = vadd.f32 %v565, %v674
    %v683 = vadd.f32 %v571, %v674
    %v684 = vadd.f32 %v577, %v674
    %v685 = vadd.f32 %v583, %v674
    %v686 = vadd.f32 %v589, %v674
    %v687 = vadd.f32 %v595, %v674
    %v688 = vadd.f32 %v601, %v674
    %v689 = vadd.f32 %v607, %v674
    %v690 = vadd.f32 %v613, %v674
    %v691 = vmul.f32 %v675, 0.2
    %v692 = vmul.f32 %v676, 0.2
    %v693 = vmul.f32 %v677, 0.2
    %v694 = vmul.f32 %v678, 0.2
    %v695 = vmul.f32 %v679, 0.2
    %v696 = vmul.f32 %v680, 0.2
    %v697 = vmul.f32 %v681, 0.2
    %v698 = vmul.f32 %v682, 0.2
    %v699 = vmul.f32 %v683, 0.2
    %v700 = vmul.f32 %v684, 0.2
    %v701 = vmul.f32 %v685, 0.2
    %v702 = vmul.f32 %v686, 0.2
    %v703 = vmul.f32 %v687, 0.2
    %v704 = vmul.f32 %v688, 0.2
    %v705 = vmul.f32 %v689, 0.2
    %v706 = vmul.f32 %v690, 0.2
    %v707 = vmax.f32 %v675, %v691
    %v708 = vmax.f32 %v676, %v692
    %v709 = vmax.f32 %v677, %v693
    %v710 = vmax.f32 %v678, %v694
    %v711 = vmax.f32 %v679, %v695
    %v712 = vmax.f32 %v680, %v696
    %v713 = vmax.f32 %v681, %v697
    %v714 = vmax.f32 %v682, %v698
    %v715 = vmax.f32 %v683, %v699
    %v716 = vmax.f32 %v684, %v700
    %v717 = vmax.f32 %v685, %v701
    %v718 = vmax.f32 %v686, %v702
    %v719 = vmax.f32 %v687, %v703
    %v720 = vmax.f32 %v688, %v704
    %v721 = vmax.f32 %v689, %v705
    %v722 = vmax.f32 %v690, %v706
    %724 = vset.pattern.permute.xlu0 2
    %725 = vperm.xlu0 %724, %v523
    %v726 = vpop.permute.xlu0 %725
    %729 = vset.pattern.permute.xlu0 2
    %730 = vperm.xlu0 %729, %v529
    %v731 = vpop.permute.xlu0 %730
    %734 = vset.pattern.permute.xlu0 2
    %735 = vperm.xlu0 %734, %v535
    %v736 = vpop.permute.xlu0 %735
    %739 = vset.pattern.permute.xlu0 2
    %740 = vperm.xlu0 %739, %v541
    %v741 = vpop.permute.xlu0 %740
    %744 = vset.pattern.permute.xlu0 2
    %745 = vperm.xlu0 %744, %v547
    %v746 = vpop.permute.xlu0 %745
    %749 = vset.pattern.permute.xlu0 2
    %750 = vperm.xlu0 %749, %v553
    %v751 = vpop.permute.xlu0 %750
    %754 = vset.pattern.permute.xlu0 2
    %755 = vperm.xlu0 %754, %v559
    %v756 = vpop.permute.xlu0 %755
    %759 = vset.pattern.permute.xlu0 2
    %760 = vperm.xlu0 %759, %v565
    %v761 = vpop.permute.xlu0 %760
    %764 = vset.pattern.permute.xlu0 2
    %765 = vperm.xlu0 %764, %v571
    %v766 = vpop.permute.xlu0 %765
    %769 = vset.pattern.permute.xlu0 2
    %770 = vperm.xlu0 %769, %v577
    %v771 = vpop.permute.xlu0 %770
    %774 = vset.pattern.permute.xlu0 2
    %775 = vperm.xlu0 %774, %v583
    %v776 = vpop.permute.xlu0 %775
    %779 = vset.pattern.permute.xlu0 2
    %780 = vperm.xlu0 %779, %v589
    %v781 = vpop.permute.xlu0 %780
    %784 = vset.pattern.permute.xlu0 2
    %785 = vperm.xlu0 %784, %v595
    %v786 = vpop.permute.xlu0 %785
    %789 = vset.pattern.permute.xlu0 2
    %790 = vperm.xlu0 %789, %v601
    %v791 = vpop.permute.xlu0 %790
    %794 = vset.pattern.permute.xlu0 2
    %795 = vperm.xlu0 %794, %v607
    %v796 = vpop.permute.xlu0 %795
    %799 = vset.pattern.permute.xlu0 2
    %800 = vperm.xlu0 %799, %v613
    %v801 = vpop.permute.xlu0 %800
    %v803 = vlaneseq
    %v804 = vshrl.u32 %v803, 7
    %v805 = vsub.s32 0, %v804
    %v806 = vrot.slane %v651, %v805
    %v807 = vadd.f32 %v726, %v806
    %v808 = vadd.f32 %v731, %v806
    %v809 = vadd.f32 %v736, %v806
    %v810 = vadd.f32 %v741, %v806
    %v811 = vadd.f32 %v746, %v806
    %v812 = vadd.f32 %v751, %v806
    %v813 = vadd.f32 %v756, %v806
    %v814 = vadd.f32 %v761, %v806
    %v815 = vadd.f32 %v766, %v806
    %v816 = vadd.f32 %v771, %v806
    %v817 = vadd.f32 %v776, %v806
    %v818 = vadd.f32 %v781, %v806
    %v819 = vadd.f32 %v786, %v806
    %v820 = vadd.f32 %v791, %v806
    %v821 = vadd.f32 %v796, %v806
    %v822 = vadd.f32 %v801, %v806
    %v823 = vmul.f32 %v807, 0.2
    %v824 = vmul.f32 %v808, 0.2
    %v825 = vmul.f32 %v809, 0.2
    %v826 = vmul.f32 %v810, 0.2
    %v827 = vmul.f32 %v811, 0.2
    %v828 = vmul.f32 %v812, 0.2
    %v829 = vmul.f32 %v813, 0.2
    %v830 = vmul.f32 %v814, 0.2
    %v831 = vmul.f32 %v815, 0.2
    %v832 = vmul.f32 %v816, 0.2
    %v833 = vmul.f32 %v817, 0.2
    %v834 = vmul.f32 %v818, 0.2
    %v835 = vmul.f32 %v819, 0.2
    %v836 = vmul.f32 %v820, 0.2
    %v837 = vmul.f32 %v821, 0.2
    %v838 = vmul.f32 %v822, 0.2
    %v839 = vmax.f32 %v807, %v823
    %v840 = vmax.f32 %v808, %v824
    %v841 = vmax.f32 %v809, %v825
    %v842 = vmax.f32 %v810, %v826
    %v843 = vmax.f32 %v811, %v827
    %v844 = vmax.f32 %v812, %v828
    %v845 = vmax.f32 %v813, %v829
    %v846 = vmax.f32 %v814, %v830
    %v847 = vmax.f32 %v815, %v831
    %v848 = vmax.f32 %v816, %v832
    %v849 = vmax.f32 %v817, %v833
    %v850 = vmax.f32 %v818, %v834
    %v851 = vmax.f32 %v819, %v835
    %v852 = vmax.f32 %v820, %v836
    %v853 = vmax.f32 %v821, %v837
    %v854 = vmax.f32 %v822, %v838
    %856 = vset.pattern.permute.xlu0 2
    %857 = vperm.xlu0 %856, %v707
    %v858 = vpop.permute.xlu0 %857
    %861 = vset.pattern.permute.xlu0 2
    %862 = vperm.xlu0 %861, %v708
    %v863 = vpop.permute.xlu0 %862
    %866 = vset.pattern.permute.xlu0 2
    %867 = vperm.xlu0 %866, %v709
    %v868 = vpop.permute.xlu0 %867
    %871 = vset.pattern.permute.xlu0 2
    %872 = vperm.xlu0 %871, %v710
    %v873 = vpop.permute.xlu0 %872
    %876 = vset.pattern.permute.xlu0 2
    %877 = vperm.xlu0 %876, %v711
    %v878 = vpop.permute.xlu0 %877
    %881 = vset.pattern.permute.xlu0 2
    %882 = vperm.xlu0 %881, %v712
    %v883 = vpop.permute.xlu0 %882
    %886 = vset.pattern.permute.xlu0 2
    %887 = vperm.xlu0 %886, %v713
    %v888 = vpop.permute.xlu0 %887
    %891 = vset.pattern.permute.xlu0 2
    %892 = vperm.xlu0 %891, %v714
    %v893 = vpop.permute.xlu0 %892
    %896 = vset.pattern.permute.xlu0 2
    %897 = vperm.xlu0 %896, %v715
    %v898 = vpop.permute.xlu0 %897
    %901 = vset.pattern.permute.xlu0 2
    %902 = vperm.xlu0 %901, %v716
    %v903 = vpop.permute.xlu0 %902
    %906 = vset.pattern.permute.xlu0 2
    %907 = vperm.xlu0 %906, %v717
    %v908 = vpop.permute.xlu0 %907
    %911 = vset.pattern.permute.xlu0 2
    %912 = vperm.xlu0 %911, %v718
    %v913 = vpop.permute.xlu0 %912
    %916 = vset.pattern.permute.xlu0 2
    %917 = vperm.xlu0 %916, %v719
    %v918 = vpop.permute.xlu0 %917
    %921 = vset.pattern.permute.xlu0 2
    %922 = vperm.xlu0 %921, %v720
    %v923 = vpop.permute.xlu0 %922
    %926 = vset.pattern.permute.xlu0 2
    %927 = vperm.xlu0 %926, %v721
    %v928 = vpop.permute.xlu0 %927
    %931 = vset.pattern.permute.xlu0 2
    %932 = vperm.xlu0 %931, %v722
    %v933 = vpop.permute.xlu0 %932
    %v935 = vsub.f32 %v839, %v858
    %v936 = vsub.f32 %v840, %v863
    %v937 = vsub.f32 %v841, %v868
    %v938 = vsub.f32 %v842, %v873
    %v939 = vsub.f32 %v843, %v878
    %v940 = vsub.f32 %v844, %v883
    %v941 = vsub.f32 %v845, %v888
    %v942 = vsub.f32 %v846, %v893
    %v943 = vsub.f32 %v847, %v898
    %v944 = vsub.f32 %v848, %v903
    %v945 = vsub.f32 %v849, %v908
    %v946 = vsub.f32 %v850, %v913
    %v947 = vsub.f32 %v851, %v918
    %v948 = vsub.f32 %v852, %v923
    %v949 = vsub.f32 %v853, %v928
    %v950 = vsub.f32 %v854, %v933
    %v951 = vmul.f32 %v935, 1.442695
    %v952 = vpow.pop %v951
    %v953 = vmul.f32 %v936, 1.442695
    %v954 = vpow.pop %v953
    %v955 = vmul.f32 %v937, 1.442695
    %v956 = vpow.pop %v955
    %v957 = vmul.f32 %v938, 1.442695
    %v958 = vpow.pop %v957
    %v959 = vmul.f32 %v939, 1.442695
    %v960 = vpow.pop %v959
    %v961 = vmul.f32 %v940, 1.442695
    %v962 = vpow.pop %v961
    %v963 = vmul.f32 %v941, 1.442695
    %v964 = vpow.pop %v963
    %v965 = vmul.f32 %v942, 1.442695
    %v966 = vpow.pop %v965
    %v967 = vmul.f32 %v943, 1.442695
    %v968 = vpow.pop %v967
    %v969 = vmul.f32 %v944, 1.442695
    %v970 = vpow.pop %v969
    %v971 = vmul.f32 %v945, 1.442695
    %v972 = vpow.pop %v971
    %v973 = vmul.f32 %v946, 1.442695
    %v974 = vpow.pop %v973
    %v975 = vmul.f32 %v947, 1.442695
    %v976 = vpow.pop %v975
    %v977 = vmul.f32 %v948, 1.442695
    %v978 = vpow.pop %v977
    %v979 = vmul.f32 %v949, 1.442695
    %v980 = vpow.pop %v979
    %v981 = vmul.f32 %v950, 1.442695
    %v982 = vpow.pop %v981
    %v983 = vunpack.c.l.bf16 %v35
    %v984 = vunpack.c.l.bf16 %v36
    %v985 = vunpack.c.l.bf16 %v37
    %v986 = vunpack.c.l.bf16 %v38
    %v987 = vunpack.c.l.bf16 %v39
    %v988 = vunpack.c.l.bf16 %v40
    %v989 = vunpack.c.l.bf16 %v41
    %v990 = vunpack.c.l.bf16 %v42
    %v991 = vunpack.c.l.bf16 %v43
    %v992 = vunpack.c.l.bf16 %v44
    %v993 = vunpack.c.l.bf16 %v45
    %v994 = vunpack.c.l.bf16 %v46
    %v995 = vunpack.c.l.bf16 %v47
    %v996 = vunpack.c.l.bf16 %v48
    %v997 = vunpack.c.l.bf16 %v49
    %v998 = vunpack.c.l.bf16 %v50
    %v999 = vmul.f32 %v952, %v983
    %v1000 = vmul.f32 %v954, %v984
    %v1001 = vmul.f32 %v956, %v985
    %v1002 = vmul.f32 %v958, %v986
    %v1003 = vmul.f32 %v960, %v987
    %v1004 = vmul.f32 %v962, %v988
    %v1005 = vmul.f32 %v964, %v989
    %v1006 = vmul.f32 %v966, %v990
    %v1007 = vmul.f32 %v968, %v991
    %v1008 = vmul.f32 %v970, %v992
    %v1009 = vmul.f32 %v972, %v993
    %v1010 = vmul.f32 %v974, %v994
    %v1011 = vmul.f32 %v976, %v995
    %v1012 = vmul.f32 %v978, %v996
    %v1013 = vmul.f32 %v980, %v997
    %v1014 = vmul.f32 %v982, %v998
    %1015 = vadd.xlane.f32.xlu0 %v999
    %v1016 = vpop.xlane.xlu0 %1015
    %1017 = vadd.xlane.f32.xlu0 %v1000
    %v1018 = vpop.xlane.xlu0 %1017
    %1019 = vadd.xlane.f32.xlu0 %v1001
    %v1020 = vpop.xlane.xlu0 %1019
    %1021 = vadd.xlane.f32.xlu0 %v1002
    %v1022 = vpop.xlane.xlu0 %1021
    %1023 = vadd.xlane.f32.xlu0 %v1003
    %v1024 = vpop.xlane.xlu0 %1023
    %1025 = vadd.xlane.f32.xlu0 %v1004
    %v1026 = vpop.xlane.xlu0 %1025
    %1027 = vadd.xlane.f32.xlu0 %v1005
    %v1028 = vpop.xlane.xlu0 %1027
    %1029 = vadd.xlane.f32.xlu0 %v1006
    %v1030 = vpop.xlane.xlu0 %1029
    %1031 = vadd.xlane.f32.xlu0 %v1007
    %v1032 = vpop.xlane.xlu0 %1031
    %1033 = vadd.xlane.f32.xlu0 %v1008
    %v1034 = vpop.xlane.xlu0 %1033
    %1035 = vadd.xlane.f32.xlu0 %v1009
    %v1036 = vpop.xlane.xlu0 %1035
    %1037 = vadd.xlane.f32.xlu0 %v1010
    %v1038 = vpop.xlane.xlu0 %1037
    %1039 = vadd.xlane.f32.xlu0 %v1011
    %v1040 = vpop.xlane.xlu0 %1039
    %1041 = vadd.xlane.f32.xlu0 %v1012
    %v1042 = vpop.xlane.xlu0 %1041
    %1043 = vadd.xlane.f32.xlu0 %v1013
    %v1044 = vpop.xlane.xlu0 %1043
    %1045 = vadd.xlane.f32.xlu0 %v1014
    %v1046 = vpop.xlane.xlu0 %1045
    %v1047 = vpack.c.bf16 %v1000, %v999
    %v1048 = vpack.c.bf16 %v1002, %v1001
    %v1049 = vpack.c.bf16 %v1004, %v1003
    %v1050 = vpack.c.bf16 %v1006, %v1005
    %v1051 = vpack.c.bf16 %v1008, %v1007
    %v1052 = vpack.c.bf16 %v1010, %v1009
    %v1053 = vpack.c.bf16 %v1012, %v1011
    %v1054 = vpack.c.bf16 %v1014, %v1013
    %v1055 = vpack.c.bf16 %v368, %v362
    %v1056 = vpack.c.bf16 %v380, %v374
    %v1057 = vpack.c.bf16 %v392, %v386
    %v1058 = vpack.c.bf16 %v404, %v398
    %v1059 = vpack.c.bf16 %v416, %v410
    %v1060 = vpack.c.bf16 %v428, %v422
    %v1061 = vpack.c.bf16 %v440, %v434
    %v1062 = vpack.c.bf16 %v452, %v446
    %1063 = vmatprep.subr.bf16.mxu0 0
    %1064 = vmatpush1.bf16.msra.mxu0 %v1055
    %1065 = vmatprep.subr.bf16.mxu0 0
    %1066 = vmatpush1.bf16.msra.mxu0 %v1056
    %1067 = vmatprep.subr.bf16.mxu0 0
    %1068 = vmatpush1.bf16.msra.mxu0 %v1057
    %1069 = vmatprep.subr.bf16.mxu0 0
    %1070 = vmatpush1.bf16.msra.mxu0 %v1058
    %1071 = vmatprep.subr.bf16.mxu0 0
    %1072 = vmatpush1.bf16.msra.mxu0 %v1059
    %1073 = vmatprep.subr.bf16.mxu0 0
    %1074 = vmatpush1.bf16.msra.mxu0 %v1060
    %1075 = vmatprep.subr.bf16.mxu0 0
    %1076 = vmatpush1.bf16.msra.mxu0 %v1061
    %1077 = vmatprep.subr.bf16.mxu0 0
    %1078 = vmatpush1.bf16.msra.mxu0 %v1062
    %1079 = vmatprep.subr.bf16.mxu0 0
    %1080 = vmatpush1.bf16.msra.mxu0 0
    %1081 = vmatprep.subr.bf16.mxu0 0
    %1082 = vmatpush1.bf16.msra.mxu0 0
    %1083 = vmatprep.subr.bf16.mxu0 0
    %1084 = vmatpush1.bf16.msra.mxu0 0
    %1085 = vmatprep.subr.bf16.mxu0 0
    %1086 = vmatpush1.bf16.msra.mxu0 0
    %1087 = vmatprep.subr.bf16.mxu0 0
    %1088 = vmatpush1.bf16.msra.mxu0 0
    %1089 = vmatprep.subr.bf16.mxu0 0
    %1090 = vmatpush1.bf16.msra.mxu0 0
    %1091 = vmatprep.subr.bf16.mxu0 0
    %1092 = vmatpush1.bf16.msra.mxu0 0
    %1093 = vmatprep.subr.bf16.mxu0 0
    %1094 = vmatpush1.bf16.msra.mxu0 0
    %1095 = vmatprep.mubr.bf16.mxu0 0
    %1096 = vmatmul.mubr.bf16.gmra.mrb[0].mxu0 %v1047
    %v1097 = vpop.f32.mrb[0].mxu0
    %v1098 = vadd.f32 0.0, %v1097
    %v1099 = vpop.f32.mrb[0].mxu0
    %v1100 = vpop.f32.mrb[0].mxu0
    %v1101 = vadd.f32 0.0, %v1100
    %v1102 = vpop.f32.mrb[0].mxu0
    %1103 = vmatprep.mubr.bf16.mxu0 0
    %1104 = vmatmul.mubr.bf16.gmra.mrb[0].mxu0 %v1048
    %v1105 = vpop.f32.mrb[0].mxu0
    %v1106 = vadd.f32 0.0, %v1105
    %v1107 = vpop.f32.mrb[0].mxu0
    %v1108 = vpop.f32.mrb[0].mxu0
    %v1109 = vadd.f32 0.0, %v1108
    %v1110 = vpop.f32.mrb[0].mxu0
    %1111 = vmatprep.mubr.bf16.mxu0 0
    %1112 = vmatmul.mubr.bf16.gmra.mrb[0].mxu0 %v1049
    %v1113 = vpop.f32.mrb[0].mxu0
    %v1114 = vadd.f32 0.0, %v1113
    %v1115 = vpop.f32.mrb[0].mxu0
    %v1116 = vpop.f32.mrb[0].mxu0
    %v1117 = vadd.f32 0.0, %v1116
    %v1118 = vpop.f32.mrb[0].mxu0
    %1119 = vmatprep.mubr.bf16.mxu0 0
    %1120 = vmatmul.mubr.bf16.gmra.mrb[0].mxu0 %v1050
    %v1121 = vpop.f32.mrb[0].mxu0
    %v1122 = vadd.f32 0.0, %v1121
    %v1123 = vpop.f32.mrb[0].mxu0
    %v1124 = vpop.f32.mrb[0].mxu0
    %v1125 = vadd.f32 0.0, %v1124
    %v1126 = vpop.f32.mrb[0].mxu0
    %1127 = vmatprep.mubr.bf16.mxu0 0
    %1128 = vmatmul.mubr.bf16.gmra.mrb[0].mxu0 %v1051
    %v1129 = vpop.f32.mrb[0].mxu0
    %v1130 = vadd.f32 0.0, %v1129
    %v1131 = vpop.f32.mrb[0].mxu0
    %v1132 = vpop.f32.mrb[0].mxu0
    %v1133 = vadd.f32 0.0, %v1132
    %v1134 = vpop.f32.mrb[0].mxu0
    %1135 = vmatprep.mubr.bf16.mxu0 0
    %1136 = vmatmul.mubr.bf16.gmra.mrb[0].mxu0 %v1052
    %v1137 = vpop.f32.mrb[0].mxu0
    %v1138 = vadd.f32 0.0, %v1137
    %v1139 = vpop.f32.mrb[0].mxu0
    %v1140 = vpop.f32.mrb[0].mxu0
    %v1141 = vadd.f32 0.0, %v1140
    %v1142 = vpop.f32.mrb[0].mxu0
    %1143 = vmatprep.mubr.bf16.mxu0 0
    %1144 = vmatmul.mubr.bf16.gmra.mrb[0].mxu0 %v1053
    %v1145 = vpop.f32.mrb[0].mxu0
    %v1146 = vadd.f32 0.0, %v1145
    %v1147 = vpop.f32.mrb[0].mxu0
    %v1148 = vpop.f32.mrb[0].mxu0
    %v1149 = vadd.f32 0.0, %v1148
    %v1150 = vpop.f32.mrb[0].mxu0
    %1151 = vmatprep.mubr.bf16.mxu0 0
    %1152 = vmatmul.mubr.bf16.gmra.mrb[0].mxu0 %v1054
    %v1153 = vpop.f32.mrb[0].mxu0
    %v1154 = vadd.f32 0.0, %v1153
    %v1155 = vpop.f32.mrb[0].mxu0
    %v1156 = vpop.f32.mrb[0].mxu0
    %v1157 = vadd.f32 0.0, %v1156
    %v1158 = vpop.f32.mrb[0].mxu0
    %1159 = vdwg.mxu0
    %v1160 = vrcp.pop %v1016
    %v1161 = vrcp.pop %v1018
    %v1162 = vrcp.pop %v1020
    %v1163 = vrcp.pop %v1022
    %v1164 = vrcp.pop %v1024
    %v1165 = vrcp.pop %v1026
    %v1166 = vrcp.pop %v1028
    %v1167 = vrcp.pop %v1030
    %v1168 = vrcp.pop %v1032
    %v1169 = vrcp.pop %v1034
    %v1170 = vrcp.pop %v1036
    %v1171 = vrcp.pop %v1038
    %v1172 = vrcp.pop %v1040
    %v1173 = vrcp.pop %v1042
    %v1174 = vrcp.pop %v1044
    %v1175 = vrcp.pop %v1046
    %v1176 = vmul.f32 %v1098, %v1160
    %v1177 = vmul.f32 %v1101, %v1161
    %v1178 = vmul.f32 %v1106, %v1162
    %v1179 = vmul.f32 %v1109, %v1163
    %v1180 = vmul.f32 %v1114, %v1164
    %v1181 = vmul.f32 %v1117, %v1165
    %v1182 = vmul.f32 %v1122, %v1166
    %v1183 = vmul.f32 %v1125, %v1167
    %v1184 = vmul.f32 %v1130, %v1168
    %v1185 = vmul.f32 %v1133, %v1169
    %v1186 = vmul.f32 %v1138, %v1170
    %v1187 = vmul.f32 %v1141, %v1171
    %v1188 = vmul.f32 %v1146, %v1172
    %v1189 = vmul.f32 %v1149, %v1173
    %v1190 = vmul.f32 %v1154, %v1174
    %v1191 = vmul.f32 %v1157, %v1175
    %vm1192 = vcmask 1041409
    %v1193 = vsel %vm1192, %v651, -inf
    %1194 = vmax.xlane.f32.xlu0 %v1193
    %v1195 = vpop.xlane.xlu0 %1194
    %v1196 = vlaneseq
    %v1197 = vshrl.u32 %v1196, 7
    %v1198 = vsub.s32 1, %v1197
    %v1199 = vrot.slane %v1195, %v1198
    %v1200 = vadd.f32 %v523, %v1199
    %v1201 = vadd.f32 %v529, %v1199
    %v1202 = vadd.f32 %v535, %v1199
    %v1203 = vadd.f32 %v541, %v1199
    %v1204 = vadd.f32 %v547, %v1199
    %v1205 = vadd.f32 %v553, %v1199
    %v1206 = vadd.f32 %v559, %v1199
    %v1207 = vadd.f32 %v565, %v1199
    %v1208 = vadd.f32 %v571, %v1199
    %v1209 = vadd.f32 %v577, %v1199
    %v1210 = vadd.f32 %v583, %v1199
    %v1211 = vadd.f32 %v589, %v1199
    %v1212 = vadd.f32 %v595, %v1199
    %v1213 = vadd.f32 %v601, %v1199
    %v1214 = vadd.f32 %v607, %v1199
    %v1215 = vadd.f32 %v613, %v1199
    %v1216 = vmul.f32 %v1200, 0.2
    %v1217 = vmul.f32 %v1201, 0.2
    %v1218 = vmul.f32 %v1202, 0.2
    %v1219 = vmul.f32 %v1203, 0.2
    %v1220 = vmul.f32 %v1204, 0.2
    %v1221 = vmul.f32 %v1205, 0.2
    %v1222 = vmul.f32 %v1206, 0.2
    %v1223 = vmul.f32 %v1207, 0.2
    %v1224 = vmul.f32 %v1208, 0.2
    %v1225 = vmul.f32 %v1209, 0.2
    %v1226 = vmul.f32 %v1210, 0.2
    %v1227 = vmul.f32 %v1211, 0.2
    %v1228 = vmul.f32 %v1212, 0.2
    %v1229 = vmul.f32 %v1213, 0.2
    %v1230 = vmul.f32 %v1214, 0.2
    %v1231 = vmul.f32 %v1215, 0.2
    %v1232 = vmax.f32 %v1200, %v1216
    %v1233 = vmax.f32 %v1201, %v1217
    %v1234 = vmax.f32 %v1202, %v1218
    %v1235 = vmax.f32 %v1203, %v1219
    %v1236 = vmax.f32 %v1204, %v1220
    %v1237 = vmax.f32 %v1205, %v1221
    %v1238 = vmax.f32 %v1206, %v1222
    %v1239 = vmax.f32 %v1207, %v1223
    %v1240 = vmax.f32 %v1208, %v1224
    %v1241 = vmax.f32 %v1209, %v1225
    %v1242 = vmax.f32 %v1210, %v1226
    %v1243 = vmax.f32 %v1211, %v1227
    %v1244 = vmax.f32 %v1212, %v1228
    %v1245 = vmax.f32 %v1213, %v1229
    %v1246 = vmax.f32 %v1214, %v1230
    %v1247 = vmax.f32 %v1215, %v1231
    %1248 = vset.pattern.permute.xlu0 3
    %1249 = vperm.xlu0 %1248, %v523
    %v1250 = vpop.permute.xlu0 %1249
    %1252 = vset.pattern.permute.xlu0 3
    %1253 = vperm.xlu0 %1252, %v529
    %v1254 = vpop.permute.xlu0 %1253
    %1256 = vset.pattern.permute.xlu0 3
    %1257 = vperm.xlu0 %1256, %v535
    %v1258 = vpop.permute.xlu0 %1257
    %1260 = vset.pattern.permute.xlu0 3
    %1261 = vperm.xlu0 %1260, %v541
    %v1262 = vpop.permute.xlu0 %1261
    %1264 = vset.pattern.permute.xlu0 3
    %1265 = vperm.xlu0 %1264, %v547
    %v1266 = vpop.permute.xlu0 %1265
    %1268 = vset.pattern.permute.xlu0 3
    %1269 = vperm.xlu0 %1268, %v553
    %v1270 = vpop.permute.xlu0 %1269
    %1272 = vset.pattern.permute.xlu0 3
    %1273 = vperm.xlu0 %1272, %v559
    %v1274 = vpop.permute.xlu0 %1273
    %1276 = vset.pattern.permute.xlu0 3
    %1277 = vperm.xlu0 %1276, %v565
    %v1278 = vpop.permute.xlu0 %1277
    %1280 = vset.pattern.permute.xlu0 3
    %1281 = vperm.xlu0 %1280, %v571
    %v1282 = vpop.permute.xlu0 %1281
    %1284 = vset.pattern.permute.xlu0 3
    %1285 = vperm.xlu0 %1284, %v577
    %v1286 = vpop.permute.xlu0 %1285
    %1288 = vset.pattern.permute.xlu0 3
    %1289 = vperm.xlu0 %1288, %v583
    %v1290 = vpop.permute.xlu0 %1289
    %1292 = vset.pattern.permute.xlu0 3
    %1293 = vperm.xlu0 %1292, %v589
    %v1294 = vpop.permute.xlu0 %1293
    %1296 = vset.pattern.permute.xlu0 3
    %1297 = vperm.xlu0 %1296, %v595
    %v1298 = vpop.permute.xlu0 %1297
    %1300 = vset.pattern.permute.xlu0 3
    %1301 = vperm.xlu0 %1300, %v601
    %v1302 = vpop.permute.xlu0 %1301
    %1304 = vset.pattern.permute.xlu0 3
    %1305 = vperm.xlu0 %1304, %v607
    %v1306 = vpop.permute.xlu0 %1305
    %1308 = vset.pattern.permute.xlu0 3
    %1309 = vperm.xlu0 %1308, %v613
    %v1310 = vpop.permute.xlu0 %1309
    %v1312 = vlaneseq
    %v1313 = vshrl.u32 %v1312, 7
    %v1314 = vsub.s32 1, %v1313
    %v1315 = vrot.slane %v651, %v1314
    %v1316 = vadd.f32 %v1250, %v1315
    %v1317 = vadd.f32 %v1254, %v1315
    %v1318 = vadd.f32 %v1258, %v1315
    %v1319 = vadd.f32 %v1262, %v1315
    %v1320 = vadd.f32 %v1266, %v1315
    %v1321 = vadd.f32 %v1270, %v1315
    %v1322 = vadd.f32 %v1274, %v1315
    %v1323 = vadd.f32 %v1278, %v1315
    %v1324 = vadd.f32 %v1282, %v1315
    %v1325 = vadd.f32 %v1286, %v1315
    %v1326 = vadd.f32 %v1290, %v1315
    %v1327 = vadd.f32 %v1294, %v1315
    %v1328 = vadd.f32 %v1298, %v1315
    %v1329 = vadd.f32 %v1302, %v1315
    %v1330 = vadd.f32 %v1306, %v1315
    %v1331 = vadd.f32 %v1310, %v1315
    %v1332 = vmul.f32 %v1316, 0.2
    %v1333 = vmul.f32 %v1317, 0.2
    %v1334 = vmul.f32 %v1318, 0.2
    %v1335 = vmul.f32 %v1319, 0.2
    %v1336 = vmul.f32 %v1320, 0.2
    %v1337 = vmul.f32 %v1321, 0.2
    %v1338 = vmul.f32 %v1322, 0.2
    %v1339 = vmul.f32 %v1323, 0.2
    %v1340 = vmul.f32 %v1324, 0.2
    %v1341 = vmul.f32 %v1325, 0.2
    %v1342 = vmul.f32 %v1326, 0.2
    %v1343 = vmul.f32 %v1327, 0.2
    %v1344 = vmul.f32 %v1328, 0.2
    %v1345 = vmul.f32 %v1329, 0.2
    %v1346 = vmul.f32 %v1330, 0.2
    %v1347 = vmul.f32 %v1331, 0.2
    %v1348 = vmax.f32 %v1316, %v1332
    %v1349 = vmax.f32 %v1317, %v1333
    %v1350 = vmax.f32 %v1318, %v1334
    %v1351 = vmax.f32 %v1319, %v1335
    %v1352 = vmax.f32 %v1320, %v1336
    %v1353 = vmax.f32 %v1321, %v1337
    %v1354 = vmax.f32 %v1322, %v1338
    %v1355 = vmax.f32 %v1323, %v1339
    %v1356 = vmax.f32 %v1324, %v1340
    %v1357 = vmax.f32 %v1325, %v1341
    %v1358 = vmax.f32 %v1326, %v1342
    %v1359 = vmax.f32 %v1327, %v1343
    %v1360 = vmax.f32 %v1328, %v1344
    %v1361 = vmax.f32 %v1329, %v1345
    %v1362 = vmax.f32 %v1330, %v1346
    %v1363 = vmax.f32 %v1331, %v1347
    %1365 = vset.pattern.permute.xlu0 3
    %1366 = vperm.xlu0 %1365, %v1232
    %v1367 = vpop.permute.xlu0 %1366
    %1370 = vset.pattern.permute.xlu0 3
    %1371 = vperm.xlu0 %1370, %v1233
    %v1372 = vpop.permute.xlu0 %1371
    %1375 = vset.pattern.permute.xlu0 3
    %1376 = vperm.xlu0 %1375, %v1234
    %v1377 = vpop.permute.xlu0 %1376
    %1380 = vset.pattern.permute.xlu0 3
    %1381 = vperm.xlu0 %1380, %v1235
    %v1382 = vpop.permute.xlu0 %1381
    %1385 = vset.pattern.permute.xlu0 3
    %1386 = vperm.xlu0 %1385, %v1236
    %v1387 = vpop.permute.xlu0 %1386
    %1390 = vset.pattern.permute.xlu0 3
    %1391 = vperm.xlu0 %1390, %v1237
    %v1392 = vpop.permute.xlu0 %1391
    %1395 = vset.pattern.permute.xlu0 3
    %1396 = vperm.xlu0 %1395, %v1238
    %v1397 = vpop.permute.xlu0 %1396
    %1400 = vset.pattern.permute.xlu0 3
    %1401 = vperm.xlu0 %1400, %v1239
    %v1402 = vpop.permute.xlu0 %1401
    %1405 = vset.pattern.permute.xlu0 3
    %1406 = vperm.xlu0 %1405, %v1240
    %v1407 = vpop.permute.xlu0 %1406
    %1410 = vset.pattern.permute.xlu0 3
    %1411 = vperm.xlu0 %1410, %v1241
    %v1412 = vpop.permute.xlu0 %1411
    %1415 = vset.pattern.permute.xlu0 3
    %1416 = vperm.xlu0 %1415, %v1242
    %v1417 = vpop.permute.xlu0 %1416
    %1420 = vset.pattern.permute.xlu0 3
    %1421 = vperm.xlu0 %1420, %v1243
    %v1422 = vpop.permute.xlu0 %1421
    %1425 = vset.pattern.permute.xlu0 3
    %1426 = vperm.xlu0 %1425, %v1244
    %v1427 = vpop.permute.xlu0 %1426
    %1430 = vset.pattern.permute.xlu0 3
    %1431 = vperm.xlu0 %1430, %v1245
    %v1432 = vpop.permute.xlu0 %1431
    %1435 = vset.pattern.permute.xlu0 3
    %1436 = vperm.xlu0 %1435, %v1246
    %v1437 = vpop.permute.xlu0 %1436
    %1440 = vset.pattern.permute.xlu0 3
    %1441 = vperm.xlu0 %1440, %v1247
    %v1442 = vpop.permute.xlu0 %1441
    %v1444 = vsub.f32 %v1348, %v1367
    %v1445 = vsub.f32 %v1349, %v1372
    %v1446 = vsub.f32 %v1350, %v1377
    %v1447 = vsub.f32 %v1351, %v1382
    %v1448 = vsub.f32 %v1352, %v1387
    %v1449 = vsub.f32 %v1353, %v1392
    %v1450 = vsub.f32 %v1354, %v1397
    %v1451 = vsub.f32 %v1355, %v1402
    %v1452 = vsub.f32 %v1356, %v1407
    %v1453 = vsub.f32 %v1357, %v1412
    %v1454 = vsub.f32 %v1358, %v1417
    %v1455 = vsub.f32 %v1359, %v1422
    %v1456 = vsub.f32 %v1360, %v1427
    %v1457 = vsub.f32 %v1361, %v1432
    %v1458 = vsub.f32 %v1362, %v1437
    %v1459 = vsub.f32 %v1363, %v1442
    %v1460 = vmul.f32 %v1444, 1.442695
    %v1461 = vpow.pop %v1460
    %v1462 = vmul.f32 %v1445, 1.442695
    %v1463 = vpow.pop %v1462
    %v1464 = vmul.f32 %v1446, 1.442695
    %v1465 = vpow.pop %v1464
    %v1466 = vmul.f32 %v1447, 1.442695
    %v1467 = vpow.pop %v1466
    %v1468 = vmul.f32 %v1448, 1.442695
    %v1469 = vpow.pop %v1468
    %v1470 = vmul.f32 %v1449, 1.442695
    %v1471 = vpow.pop %v1470
    %v1472 = vmul.f32 %v1450, 1.442695
    %v1473 = vpow.pop %v1472
    %v1474 = vmul.f32 %v1451, 1.442695
    %v1475 = vpow.pop %v1474
    %v1476 = vmul.f32 %v1452, 1.442695
    %v1477 = vpow.pop %v1476
    %v1478 = vmul.f32 %v1453, 1.442695
    %v1479 = vpow.pop %v1478
    %v1480 = vmul.f32 %v1454, 1.442695
    %v1481 = vpow.pop %v1480
    %v1482 = vmul.f32 %v1455, 1.442695
    %v1483 = vpow.pop %v1482
    %v1484 = vmul.f32 %v1456, 1.442695
    %v1485 = vpow.pop %v1484
    %v1486 = vmul.f32 %v1457, 1.442695
    %v1487 = vpow.pop %v1486
    %v1488 = vmul.f32 %v1458, 1.442695
    %v1489 = vpow.pop %v1488
    %v1490 = vmul.f32 %v1459, 1.442695
    %v1491 = vpow.pop %v1490
    %v1492 = vmul.f32 %v1461, %v983
    %v1493 = vmul.f32 %v1463, %v984
    %v1494 = vmul.f32 %v1465, %v985
    %v1495 = vmul.f32 %v1467, %v986
    %v1496 = vmul.f32 %v1469, %v987
    %v1497 = vmul.f32 %v1471, %v988
    %v1498 = vmul.f32 %v1473, %v989
    %v1499 = vmul.f32 %v1475, %v990
    %v1500 = vmul.f32 %v1477, %v991
    %v1501 = vmul.f32 %v1479, %v992
    %v1502 = vmul.f32 %v1481, %v993
    %v1503 = vmul.f32 %v1483, %v994
    %v1504 = vmul.f32 %v1485, %v995
    %v1505 = vmul.f32 %v1487, %v996
    %v1506 = vmul.f32 %v1489, %v997
    %v1507 = vmul.f32 %v1491, %v998
    %1508 = vadd.xlane.f32.xlu0 %v1492
    %v1509 = vpop.xlane.xlu0 %1508
    %1510 = vadd.xlane.f32.xlu0 %v1493
    %v1511 = vpop.xlane.xlu0 %1510
    %1512 = vadd.xlane.f32.xlu0 %v1494
    %v1513 = vpop.xlane.xlu0 %1512
    %1514 = vadd.xlane.f32.xlu0 %v1495
    %v1515 = vpop.xlane.xlu0 %1514
    %1516 = vadd.xlane.f32.xlu0 %v1496
    %v1517 = vpop.xlane.xlu0 %1516
    %1518 = vadd.xlane.f32.xlu0 %v1497
    %v1519 = vpop.xlane.xlu0 %1518
    %1520 = vadd.xlane.f32.xlu0 %v1498
    %v1521 = vpop.xlane.xlu0 %1520
    %1522 = vadd.xlane.f32.xlu0 %v1499
    %v1523 = vpop.xlane.xlu0 %1522
    %1524 = vadd.xlane.f32.xlu0 %v1500
    %v1525 = vpop.xlane.xlu0 %1524
    %1526 = vadd.xlane.f32.xlu0 %v1501
    %v1527 = vpop.xlane.xlu0 %1526
    %1528 = vadd.xlane.f32.xlu0 %v1502
    %v1529 = vpop.xlane.xlu0 %1528
    %1530 = vadd.xlane.f32.xlu0 %v1503
    %v1531 = vpop.xlane.xlu0 %1530
    %1532 = vadd.xlane.f32.xlu0 %v1504
    %v1533 = vpop.xlane.xlu0 %1532
    %1534 = vadd.xlane.f32.xlu0 %v1505
    %v1535 = vpop.xlane.xlu0 %1534
    %1536 = vadd.xlane.f32.xlu0 %v1506
    %v1537 = vpop.xlane.xlu0 %1536
    %1538 = vadd.xlane.f32.xlu0 %v1507
    %v1539 = vpop.xlane.xlu0 %1538
    %v1540 = vpack.c.bf16 %v1493, %v1492
    %v1541 = vpack.c.bf16 %v1495, %v1494
    %v1542 = vpack.c.bf16 %v1497, %v1496
    %v1543 = vpack.c.bf16 %v1499, %v1498
    %v1544 = vpack.c.bf16 %v1501, %v1500
    %v1545 = vpack.c.bf16 %v1503, %v1502
    %v1546 = vpack.c.bf16 %v1505, %v1504
    %v1547 = vpack.c.bf16 %v1507, %v1506
    %v1548 = vpack.c.bf16 %v527, %v521
    %v1549 = vpack.c.bf16 %v539, %v533
    %v1550 = vpack.c.bf16 %v551, %v545
    %v1551 = vpack.c.bf16 %v563, %v557
    %v1552 = vpack.c.bf16 %v575, %v569
    %v1553 = vpack.c.bf16 %v587, %v581
    %v1554 = vpack.c.bf16 %v599, %v593
    %v1555 = vpack.c.bf16 %v611, %v605
    %1556 = vmatprep.subr.bf16.mxu0 0
    %1557 = vmatpush1.bf16.msra.mxu0 %v1548
    %1558 = vmatprep.subr.bf16.mxu0 0
    %1559 = vmatpush1.bf16.msra.mxu0 %v1549
    %1560 = vmatprep.subr.bf16.mxu0 0
    %1561 = vmatpush1.bf16.msra.mxu0 %v1550
    %1562 = vmatprep.subr.bf16.mxu0 0
    %1563 = vmatpush1.bf16.msra.mxu0 %v1551
    %1564 = vmatprep.subr.bf16.mxu0 0
    %1565 = vmatpush1.bf16.msra.mxu0 %v1552
    %1566 = vmatprep.subr.bf16.mxu0 0
    %1567 = vmatpush1.bf16.msra.mxu0 %v1553
    %1568 = vmatprep.subr.bf16.mxu0 0
    %1569 = vmatpush1.bf16.msra.mxu0 %v1554
    %1570 = vmatprep.subr.bf16.mxu0 0
    %1571 = vmatpush1.bf16.msra.mxu0 %v1555
    %1572 = vmatprep.subr.bf16.mxu0 0
    %1573 = vmatpush1.bf16.msra.mxu0 0
    %1574 = vmatprep.subr.bf16.mxu0 0
    %1575 = vmatpush1.bf16.msra.mxu0 0
    %1576 = vmatprep.subr.bf16.mxu0 0
    %1577 = vmatpush1.bf16.msra.mxu0 0
    %1578 = vmatprep.subr.bf16.mxu0 0
    %1579 = vmatpush1.bf16.msra.mxu0 0
    %1580 = vmatprep.subr.bf16.mxu0 0
    %1581 = vmatpush1.bf16.msra.mxu0 0
    %1582 = vmatprep.subr.bf16.mxu0 0
    %1583 = vmatpush1.bf16.msra.mxu0 0
    %1584 = vmatprep.subr.bf16.mxu0 0
    %1585 = vmatpush1.bf16.msra.mxu0 0
    %1586 = vmatprep.subr.bf16.mxu0 0
    %1587 = vmatpush1.bf16.msra.mxu0 0
    %1588 = vmatprep.mubr.bf16.mxu0 0
    %1589 = vmatmul.mubr.bf16.gmra.mrb[0].mxu0 %v1540
    %v1590 = vpop.f32.mrb[0].mxu0
    %v1591 = vadd.f32 0.0, %v1590
    %v1592 = vpop.f32.mrb[0].mxu0
    %v1593 = vpop.f32.mrb[0].mxu0
    %v1594 = vadd.f32 0.0, %v1593
    %v1595 = vpop.f32.mrb[0].mxu0
    %1596 = vmatprep.mubr.bf16.mxu0 0
    %1597 = vmatmul.mubr.bf16.gmra.mrb[0].mxu0 %v1541
    %v1598 = vpop.f32.mrb[0].mxu0
    %v1599 = vadd.f32 0.0, %v1598
    %v1600 = vpop.f32.mrb[0].mxu0
    %v1601 = vpop.f32.mrb[0].mxu0
    %v1602 = vadd.f32 0.0, %v1601
    %v1603 = vpop.f32.mrb[0].mxu0
    %1604 = vmatprep.mubr.bf16.mxu0 0
    %1605 = vmatmul.mubr.bf16.gmra.mrb[0].mxu0 %v1542
    %v1606 = vpop.f32.mrb[0].mxu0
    %v1607 = vadd.f32 0.0, %v1606
    %v1608 = vpop.f32.mrb[0].mxu0
    %v1609 = vpop.f32.mrb[0].mxu0
    %v1610 = vadd.f32 0.0, %v1609
    %v1611 = vpop.f32.mrb[0].mxu0
    %1612 = vmatprep.mubr.bf16.mxu0 0
    %1613 = vmatmul.mubr.bf16.gmra.mrb[0].mxu0 %v1543
    %v1614 = vpop.f32.mrb[0].mxu0
    %v1615 = vadd.f32 0.0, %v1614
    %v1616 = vpop.f32.mrb[0].mxu0
    %v1617 = vpop.f32.mrb[0].mxu0
    %v1618 = vadd.f32 0.0, %v1617
    %v1619 = vpop.f32.mrb[0].mxu0
    %1620 = vmatprep.mubr.bf16.mxu0 0
    %1621 = vmatmul.mubr.bf16.gmra.mrb[0].mxu0 %v1544
    %v1622 = vpop.f32.mrb[0].mxu0
    %v1623 = vadd.f32 0.0, %v1622
    %v1624 = vpop.f32.mrb[0].mxu0
    %v1625 = vpop.f32.mrb[0].mxu0
    %v1626 = vadd.f32 0.0, %v1625
    %v1627 = vpop.f32.mrb[0].mxu0
    %1628 = vmatprep.mubr.bf16.mxu0 0
    %1629 = vmatmul.mubr.bf16.gmra.mrb[0].mxu0 %v1545
    %v1630 = vpop.f32.mrb[0].mxu0
    %v1631 = vadd.f32 0.0, %v1630
    %v1632 = vpop.f32.mrb[0].mxu0
    %v1633 = vpop.f32.mrb[0].mxu0
    %v1634 = vadd.f32 0.0, %v1633
    %v1635 = vpop.f32.mrb[0].mxu0
    %1636 = vmatprep.mubr.bf16.mxu0 0
    %1637 = vmatmul.mubr.bf16.gmra.mrb[0].mxu0 %v1546
    %v1638 = vpop.f32.mrb[0].mxu0
    %v1639 = vadd.f32 0.0, %v1638
    %v1640 = vpop.f32.mrb[0].mxu0
    %v1641 = vpop.f32.mrb[0].mxu0
    %v1642 = vadd.f32 0.0, %v1641
    %v1643 = vpop.f32.mrb[0].mxu0
    %1644 = vmatprep.mubr.bf16.mxu0 0
    %1645 = vmatmul.mubr.bf16.gmra.mrb[0].mxu0 %v1547
    %v1646 = vpop.f32.mrb[0].mxu0
    %v1647 = vadd.f32 0.0, %v1646
    %v1648 = vpop.f32.mrb[0].mxu0
    %v1649 = vpop.f32.mrb[0].mxu0
    %v1650 = vadd.f32 0.0, %v1649
    %v1651 = vpop.f32.mrb[0].mxu0
    %1652 = vdwg.mxu0
    %v1653 = vrcp.pop %v1509
    %v1654 = vrcp.pop %v1511
    %v1655 = vrcp.pop %v1513
    %v1656 = vrcp.pop %v1515
    %v1657 = vrcp.pop %v1517
    %v1658 = vrcp.pop %v1519
    %v1659 = vrcp.pop %v1521
    %v1660 = vrcp.pop %v1523
    %v1661 = vrcp.pop %v1525
    %v1662 = vrcp.pop %v1527
    %v1663 = vrcp.pop %v1529
    %v1664 = vrcp.pop %v1531
    %v1665 = vrcp.pop %v1533
    %v1666 = vrcp.pop %v1535
    %v1667 = vrcp.pop %v1537
    %v1668 = vrcp.pop %v1539
    %v1669 = vmul.f32 %v1591, %v1653
    %v1670 = vmul.f32 %v1594, %v1654
    %v1671 = vmul.f32 %v1599, %v1655
    %v1672 = vmul.f32 %v1602, %v1656
    %v1673 = vmul.f32 %v1607, %v1657
    %v1674 = vmul.f32 %v1610, %v1658
    %v1675 = vmul.f32 %v1615, %v1659
    %v1676 = vmul.f32 %v1618, %v1660
    %v1677 = vmul.f32 %v1623, %v1661
    %v1678 = vmul.f32 %v1626, %v1662
    %v1679 = vmul.f32 %v1631, %v1663
    %v1680 = vmul.f32 %v1634, %v1664
    %v1681 = vmul.f32 %v1639, %v1665
    %v1682 = vmul.f32 %v1642, %v1666
    %v1683 = vmul.f32 %v1647, %v1667
    %v1684 = vmul.f32 %v1650, %v1668
    %v1685 = vadd.f32 %v1176, %v1669
    %v1686 = vadd.f32 %v1177, %v1670
    %v1687 = vadd.f32 %v1178, %v1671
    %v1688 = vadd.f32 %v1179, %v1672
    %v1689 = vadd.f32 %v1180, %v1673
    %v1690 = vadd.f32 %v1181, %v1674
    %v1691 = vadd.f32 %v1182, %v1675
    %v1692 = vadd.f32 %v1183, %v1676
    %v1693 = vadd.f32 %v1184, %v1677
    %v1694 = vadd.f32 %v1185, %v1678
    %v1695 = vadd.f32 %v1186, %v1679
    %v1696 = vadd.f32 %v1187, %v1680
    %v1697 = vadd.f32 %v1188, %v1681
    %v1698 = vadd.f32 %v1189, %v1682
    %v1699 = vadd.f32 %v1190, %v1683
    %v1700 = vadd.f32 %v1191, %v1684
    %v1701 = vadd.f32 %v619, %v1685
    %v1702 = vadd.f32 %v620, %v1686
    %v1703 = vadd.f32 %v621, %v1687
    %v1704 = vadd.f32 %v622, %v1688
    %v1705 = vadd.f32 %v623, %v1689
    %v1706 = vadd.f32 %v624, %v1690
    %v1707 = vadd.f32 %v625, %v1691
    %v1708 = vadd.f32 %v626, %v1692
    %v1709 = vadd.f32 %v627, %v1693
    %v1710 = vadd.f32 %v628, %v1694
    %v1711 = vadd.f32 %v629, %v1695
    %v1712 = vadd.f32 %v630, %v1696
    %v1713 = vadd.f32 %v631, %v1697
    %v1714 = vadd.f32 %v632, %v1698
    %v1715 = vadd.f32 %v633, %v1699
    %v1716 = vadd.f32 %v634, %v1700
    %v1717 = vlaneseq
    %v1718 = vshrl.u32 %v1717, 7
    %v1719 = vsub.s32 3, %v1718
    %v1720 = vrot.slane %v51, %v1719
    %v1721 = vadd.f32 %v1701, %v1720
    %v1722 = vadd.f32 %v1702, %v1720
    %v1723 = vadd.f32 %v1703, %v1720
    %v1724 = vadd.f32 %v1704, %v1720
    %v1725 = vadd.f32 %v1705, %v1720
    %v1726 = vadd.f32 %v1706, %v1720
    %v1727 = vadd.f32 %v1707, %v1720
    %v1728 = vadd.f32 %v1708, %v1720
    %v1729 = vadd.f32 %v1709, %v1720
    %v1730 = vadd.f32 %v1710, %v1720
    %v1731 = vadd.f32 %v1711, %v1720
    %v1732 = vadd.f32 %v1712, %v1720
    %v1733 = vadd.f32 %v1713, %v1720
    %v1734 = vadd.f32 %v1714, %v1720
    %v1735 = vadd.f32 %v1715, %v1720
    %v1736 = vadd.f32 %v1716, %v1720
    %v1737 = vmax.f32 %v1721, 0.0
    %v1738 = vmax.f32 %v1722, 0.0
    %v1739 = vmax.f32 %v1723, 0.0
    %v1740 = vmax.f32 %v1724, 0.0
    %v1741 = vmax.f32 %v1725, 0.0
    %v1742 = vmax.f32 %v1726, 0.0
    %v1743 = vmax.f32 %v1727, 0.0
    %v1744 = vmax.f32 %v1728, 0.0
    %v1745 = vmax.f32 %v1729, 0.0
    %v1746 = vmax.f32 %v1730, 0.0
    %v1747 = vmax.f32 %v1731, 0.0
    %v1748 = vmax.f32 %v1732, 0.0
    %v1749 = vmax.f32 %v1733, 0.0
    %v1750 = vmax.f32 %v1734, 0.0
    %v1751 = vmax.f32 %v1735, 0.0
    %v1752 = vmax.f32 %v1736, 0.0
    %v1753 = vadd.f32 %v1737, %v1738
    %v1754 = vadd.f32 %v1753, %v1739
    %v1755 = vadd.f32 %v1754, %v1740
    %v1756 = vadd.f32 %v1755, %v1741
    %v1757 = vadd.f32 %v1756, %v1742
    %v1758 = vadd.f32 %v1757, %v1743
    %v1759 = vadd.f32 %v1758, %v1744
    %v1760 = vadd.f32 %v1759, %v1745
    %v1761 = vadd.f32 %v1760, %v1746
    %v1762 = vadd.f32 %v1761, %v1747
    %v1763 = vadd.f32 %v1762, %v1748
    %v1764 = vadd.f32 %v1763, %v1749
    %v1765 = vadd.f32 %v1764, %v1750
    %v1766 = vadd.f32 %v1765, %v1751
    %v1767 = vadd.f32 %v1766, %v1752
    %v1768 = vrot.slane %v1767, 4
    %v1769 = vadd.f32 %v1767, %v1768
    %v1770 = vrot.slane %v1769, 2
    %v1771 = vadd.f32 %v1769, %v1770
    %v1772 = vrot.slane %v1771, 1
    %v1773 = vadd.f32 %v1771, %v1772
    %v1774 = vmul.f32 %v1773, 0.0078125
    %v1775 = vmul.f32 %v1737, %v1737
    %v1776 = vmul.f32 %v1738, %v1738
    %v1777 = vmul.f32 %v1739, %v1739
    %v1778 = vmul.f32 %v1740, %v1740
    %v1779 = vmul.f32 %v1741, %v1741
    %v1780 = vmul.f32 %v1742, %v1742
    %v1781 = vmul.f32 %v1743, %v1743
    %v1782 = vmul.f32 %v1744, %v1744
    %v1783 = vmul.f32 %v1745, %v1745
    %v1784 = vmul.f32 %v1746, %v1746
    %v1785 = vmul.f32 %v1747, %v1747
    %v1786 = vmul.f32 %v1748, %v1748
    %v1787 = vmul.f32 %v1749, %v1749
    %v1788 = vmul.f32 %v1750, %v1750
    %v1789 = vmul.f32 %v1751, %v1751
    %v1790 = vmul.f32 %v1752, %v1752
    %v1791 = vadd.f32 %v1775, %v1776
    %v1792 = vadd.f32 %v1791, %v1777
    %v1793 = vadd.f32 %v1792, %v1778
    %v1794 = vadd.f32 %v1793, %v1779
    %v1795 = vadd.f32 %v1794, %v1780
    %v1796 = vadd.f32 %v1795, %v1781
    %v1797 = vadd.f32 %v1796, %v1782
    %v1798 = vadd.f32 %v1797, %v1783
    %v1799 = vadd.f32 %v1798, %v1784
    %v1800 = vadd.f32 %v1799, %v1785
    %v1801 = vadd.f32 %v1800, %v1786
    %v1802 = vadd.f32 %v1801, %v1787
    %v1803 = vadd.f32 %v1802, %v1788
    %v1804 = vadd.f32 %v1803, %v1789
    %v1805 = vadd.f32 %v1804, %v1790
    %v1806 = vrot.slane %v1805, 4
    %v1807 = vadd.f32 %v1805, %v1806
    %v1808 = vrot.slane %v1807, 2
    %v1809 = vadd.f32 %v1807, %v1808
    %v1810 = vrot.slane %v1809, 1
    %v1811 = vadd.f32 %v1809, %v1810
    %v1812 = vmul.f32 %v1811, 0.0078125
    %v1813 = vmul.f32 %v1774, %v1774
    %v1814 = vsub.f32 %v1812, %v1813
    %v1815 = vsub.f32 %v1737, %v1774
    %v1816 = vsub.f32 %v1738, %v1774
    %v1817 = vsub.f32 %v1739, %v1774
    %v1818 = vsub.f32 %v1740, %v1774
    %v1819 = vsub.f32 %v1741, %v1774
    %v1820 = vsub.f32 %v1742, %v1774
    %v1821 = vsub.f32 %v1743, %v1774
    %v1822 = vsub.f32 %v1744, %v1774
    %v1823 = vsub.f32 %v1745, %v1774
    %v1824 = vsub.f32 %v1746, %v1774
    %v1825 = vsub.f32 %v1747, %v1774
    %v1826 = vsub.f32 %v1748, %v1774
    %v1827 = vsub.f32 %v1749, %v1774
    %v1828 = vsub.f32 %v1750, %v1774
    %v1829 = vsub.f32 %v1751, %v1774
    %v1830 = vsub.f32 %v1752, %v1774
    %v1831 = vadd.f32 %v1814, 1e-05
    %v1832 = vrsqrt.pop %v1831
    %v1833 = vmul.f32 %v1815, %v1832
    %v1834 = vmul.f32 %v1816, %v1832
    %v1835 = vmul.f32 %v1817, %v1832
    %v1836 = vmul.f32 %v1818, %v1832
    %v1837 = vmul.f32 %v1819, %v1832
    %v1838 = vmul.f32 %v1820, %v1832
    %v1839 = vmul.f32 %v1821, %v1832
    %v1840 = vmul.f32 %v1822, %v1832
    %v1841 = vmul.f32 %v1823, %v1832
    %v1842 = vmul.f32 %v1824, %v1832
    %v1843 = vmul.f32 %v1825, %v1832
    %v1844 = vmul.f32 %v1826, %v1832
    %v1845 = vmul.f32 %v1827, %v1832
    %v1846 = vmul.f32 %v1828, %v1832
    %v1847 = vmul.f32 %v1829, %v1832
    %v1848 = vmul.f32 %v1830, %v1832
    %v1849 = vlaneseq
    %v1850 = vshrl.u32 %v1849, 7
    %v1851 = vsub.s32 4, %v1850
    %v1852 = vrot.slane %v51, %v1851
    %v1853 = vmul.f32 %v1833, %v1852
    %v1854 = vmul.f32 %v1834, %v1852
    %v1855 = vmul.f32 %v1835, %v1852
    %v1856 = vmul.f32 %v1836, %v1852
    %v1857 = vmul.f32 %v1837, %v1852
    %v1858 = vmul.f32 %v1838, %v1852
    %v1859 = vmul.f32 %v1839, %v1852
    %v1860 = vmul.f32 %v1840, %v1852
    %v1861 = vmul.f32 %v1841, %v1852
    %v1862 = vmul.f32 %v1842, %v1852
    %v1863 = vmul.f32 %v1843, %v1852
    %v1864 = vmul.f32 %v1844, %v1852
    %v1865 = vmul.f32 %v1845, %v1852
    %v1866 = vmul.f32 %v1846, %v1852
    %v1867 = vmul.f32 %v1847, %v1852
    %v1868 = vmul.f32 %v1848, %v1852
    %v1869 = vlaneseq
    %v1870 = vshrl.u32 %v1869, 7
    %v1871 = vsub.s32 5, %v1870
    %v1872 = vrot.slane %v51, %v1871
    %v1873 = vadd.f32 %v1853, %v1872
    %v1874 = vadd.f32 %v1854, %v1872
    %v1875 = vadd.f32 %v1855, %v1872
    %v1876 = vadd.f32 %v1856, %v1872
    %v1877 = vadd.f32 %v1857, %v1872
    %v1878 = vadd.f32 %v1858, %v1872
    %v1879 = vadd.f32 %v1859, %v1872
    %v1880 = vadd.f32 %v1860, %v1872
    %v1881 = vadd.f32 %v1861, %v1872
    %v1882 = vadd.f32 %v1862, %v1872
    %v1883 = vadd.f32 %v1863, %v1872
    %v1884 = vadd.f32 %v1864, %v1872
    %v1885 = vadd.f32 %v1865, %v1872
    %v1886 = vadd.f32 %v1866, %v1872
    %v1887 = vadd.f32 %v1867, %v1872
    %v1888 = vadd.f32 %v1868, %v1872
    %v1889 = vld [vmem:[#allocation2] sm:$0xff]
    %v1890 = vld [vmem:[#allocation2 + $0x8] sm:$0xff]
    %v1891 = vld [vmem:[#allocation2 + $0x10] sm:$0xff]
    %v1892 = vld [vmem:[#allocation2 + $0x18] sm:$0xff]
    %v1893 = vld [vmem:[#allocation2 + $0x20] sm:$0xff]
    %v1894 = vld [vmem:[#allocation2 + $0x28] sm:$0xff]
    %v1895 = vld [vmem:[#allocation2 + $0x30] sm:$0xff]
    %v1896 = vld [vmem:[#allocation2 + $0x38] sm:$0xff]
    %v1897 = vld [vmem:[#allocation2 + $0x40] sm:$0xff]
    %v1898 = vld [vmem:[#allocation2 + $0x48] sm:$0xff]
    %v1899 = vld [vmem:[#allocation2 + $0x50] sm:$0xff]
    %v1900 = vld [vmem:[#allocation2 + $0x58] sm:$0xff]
    %v1901 = vld [vmem:[#allocation2 + $0x60] sm:$0xff]
    %v1902 = vld [vmem:[#allocation2 + $0x68] sm:$0xff]
    %v1903 = vld [vmem:[#allocation2 + $0x70] sm:$0xff]
    %v1904 = vld [vmem:[#allocation2 + $0x78] sm:$0xff]
    %v1905 = vld [vmem:[#allocation2 + $0x80] sm:$0xff]
    %v1906 = vld [vmem:[#allocation2 + $0x88] sm:$0xff]
    %v1907 = vld [vmem:[#allocation2 + $0x90] sm:$0xff]
    %v1908 = vld [vmem:[#allocation2 + $0x98] sm:$0xff]
    %v1909 = vld [vmem:[#allocation2 + $0xa0] sm:$0xff]
    %v1910 = vld [vmem:[#allocation2 + $0xa8] sm:$0xff]
    %v1911 = vld [vmem:[#allocation2 + $0xb0] sm:$0xff]
    %v1912 = vld [vmem:[#allocation2 + $0xb8] sm:$0xff]
    %v1913 = vld [vmem:[#allocation2 + $0xc0] sm:$0xff]
    %v1914 = vld [vmem:[#allocation2 + $0xc8] sm:$0xff]
    %v1915 = vld [vmem:[#allocation2 + $0xd0] sm:$0xff]
    %v1916 = vld [vmem:[#allocation2 + $0xd8] sm:$0xff]
    %v1917 = vld [vmem:[#allocation2 + $0xe0] sm:$0xff]
    %v1918 = vld [vmem:[#allocation2 + $0xe8] sm:$0xff]
    %v1919 = vld [vmem:[#allocation2 + $0xf0] sm:$0xff]
    %v1920 = vld [vmem:[#allocation2 + $0xf8] sm:$0xff]
    %v1921 = vld [vmem:[#allocation2 + $0x100] sm:$0xff]
    %v1922 = vld [vmem:[#allocation2 + $0x108] sm:$0xff]
    %v1923 = vld [vmem:[#allocation2 + $0x110] sm:$0xff]
    %v1924 = vld [vmem:[#allocation2 + $0x118] sm:$0xff]
    %v1925 = vld [vmem:[#allocation2 + $0x120] sm:$0xff]
    %v1926 = vld [vmem:[#allocation2 + $0x128] sm:$0xff]
    %v1927 = vld [vmem:[#allocation2 + $0x130] sm:$0xff]
    %v1928 = vld [vmem:[#allocation2 + $0x138] sm:$0xff]
    %v1929 = vld [vmem:[#allocation2 + $0x140] sm:$0xff]
    %v1930 = vld [vmem:[#allocation2 + $0x148] sm:$0xff]
    %v1931 = vld [vmem:[#allocation2 + $0x150] sm:$0xff]
    %v1932 = vld [vmem:[#allocation2 + $0x158] sm:$0xff]
    %v1933 = vld [vmem:[#allocation2 + $0x160] sm:$0xff]
    %v1934 = vld [vmem:[#allocation2 + $0x168] sm:$0xff]
    %v1935 = vld [vmem:[#allocation2 + $0x170] sm:$0xff]
    %v1936 = vld [vmem:[#allocation2 + $0x178] sm:$0xff]
    %1937 = vmatprep.subr.mxu0 %v1890
    %1938 = vmatpush1.msra.mxu0 %v1889
    %1939 = vmatprep.subr.mxu0 %v1893
    %1940 = vmatpush1.msra.mxu0 %v1892
    %1941 = vmatprep.subr.mxu0 %v1896
    %1942 = vmatpush1.msra.mxu0 %v1895
    %1943 = vmatprep.subr.mxu0 %v1899
    %1944 = vmatpush1.msra.mxu0 %v1898
    %1945 = vmatprep.subr.mxu0 %v1902
    %1946 = vmatpush1.msra.mxu0 %v1901
    %1947 = vmatprep.subr.mxu0 %v1905
    %1948 = vmatpush1.msra.mxu0 %v1904
    %1949 = vmatprep.subr.mxu0 %v1908
    %1950 = vmatpush1.msra.mxu0 %v1907
    %1951 = vmatprep.subr.mxu0 %v1911
    %1952 = vmatpush1.msra.mxu0 %v1910
    %1953 = vmatprep.subr.mxu0 %v1914
    %1954 = vmatpush1.msra.mxu0 %v1913
    %1955 = vmatprep.subr.mxu0 %v1917
    %1956 = vmatpush1.msra.mxu0 %v1916
    %1957 = vmatprep.subr.mxu0 %v1920
    %1958 = vmatpush1.msra.mxu0 %v1919
    %1959 = vmatprep.subr.mxu0 %v1923
    %1960 = vmatpush1.msra.mxu0 %v1922
    %1961 = vmatprep.subr.mxu0 %v1926
    %1962 = vmatpush1.msra.mxu0 %v1925
    %1963 = vmatprep.subr.mxu0 %v1929
    %1964 = vmatpush1.msra.mxu0 %v1928
    %1965 = vmatprep.subr.mxu0 %v1932
    %1966 = vmatpush1.msra.mxu0 %v1931
    %1967 = vmatprep.subr.mxu0 %v1935
    %1968 = vmatpush1.msra.mxu0 %v1934
    %1969 = vmatprep.subr.mxu0 0.0
    %1970 = vmatpush1.msra.mxu0 0.0
    %1971 = vmatprep.subr.mxu0 0.0
    %1972 = vmatpush1.msra.mxu0 0.0
    %1973 = vmatprep.subr.mxu0 0.0
    %1974 = vmatpush1.msra.mxu0 0.0
    %1975 = vmatprep.subr.mxu0 0.0
    %1976 = vmatpush1.msra.mxu0 0.0
    %1977 = vmatprep.subr.mxu0 0.0
    %1978 = vmatpush1.msra.mxu0 0.0
    %1979 = vmatprep.subr.mxu0 0.0
    %1980 = vmatpush1.msra.mxu0 0.0
    %1981 = vmatprep.subr.mxu0 0.0
    %1982 = vmatpush1.msra.mxu0 0.0
    %1983 = vmatprep.subr.mxu0 0.0
    %1984 = vmatpush1.msra.mxu0 0.0
    %1985 = vmatprep.subr.mxu0 0.0
    %1986 = vmatpush1.msra.mxu0 0.0
    %1987 = vmatprep.subr.mxu0 0.0
    %1988 = vmatpush1.msra.mxu0 0.0
    %1989 = vmatprep.subr.mxu0 0.0
    %1990 = vmatpush1.msra.mxu0 0.0
    %1991 = vmatprep.subr.mxu0 0.0
    %1992 = vmatpush1.msra.mxu0 0.0
    %1993 = vmatprep.subr.mxu0 0.0
    %1994 = vmatpush1.msra.mxu0 0.0
    %1995 = vmatprep.subr.mxu0 0.0
    %1996 = vmatpush1.msra.mxu0 0.0
    %1997 = vmatprep.subr.mxu0 0.0
    %1998 = vmatpush1.msra.mxu0 0.0
    %1999 = vmatprep.subr.mxu0 0.0
    %2000 = vmatpush1.msra.mxu0 0.0
    %2001 = vmatprep.mubr.f32.mxu0 0.0
    %2002 = vmatmul.mubr.f32.gmra.mrb[0].mxu0 %v1873
    %v2003 = vpop.f32.mrb[0].mxu0
    %v2004 = vadd.f32 0.0, %v2003
    %v2005 = vpop.f32.mrb[0].mxu0
    %v2006 = vadd.f32 0.0, %v2005
    %2007 = vmatprep.mubr.f32.mxu0 0.0
    %2008 = vmatmul.mubr.f32.gmra.mrb[0].mxu0 %v1874
    %v2009 = vpop.f32.mrb[0].mxu0
    %v2010 = vadd.f32 0.0, %v2009
    %v2011 = vpop.f32.mrb[0].mxu0
    %v2012 = vadd.f32 0.0, %v2011
    %2013 = vmatprep.mubr.f32.mxu0 0.0
    %2014 = vmatmul.mubr.f32.gmra.mrb[0].mxu0 %v1875
    %v2015 = vpop.f32.mrb[0].mxu0
    %v2016 = vadd.f32 0.0, %v2015
    %v2017 = vpop.f32.mrb[0].mxu0
    %v2018 = vadd.f32 0.0, %v2017
    %2019 = vmatprep.mubr.f32.mxu0 0.0
    %2020 = vmatmul.mubr.f32.gmra.mrb[0].mxu0 %v1876
    %v2021 = vpop.f32.mrb[0].mxu0
    %v2022 = vadd.f32 0.0, %v2021
    %v2023 = vpop.f32.mrb[0].mxu0
    %v2024 = vadd.f32 0.0, %v2023
    %2025 = vmatprep.mubr.f32.mxu0 0.0
    %2026 = vmatmul.mubr.f32.gmra.mrb[0].mxu0 %v1877
    %v2027 = vpop.f32.mrb[0].mxu0
    %v2028 = vadd.f32 0.0, %v2027
    %v2029 = vpop.f32.mrb[0].mxu0
    %v2030 = vadd.f32 0.0, %v2029
    %2031 = vmatprep.mubr.f32.mxu0 0.0
    %2032 = vmatmul.mubr.f32.gmra.mrb[0].mxu0 %v1878
    %v2033 = vpop.f32.mrb[0].mxu0
    %v2034 = vadd.f32 0.0, %v2033
    %v2035 = vpop.f32.mrb[0].mxu0
    %v2036 = vadd.f32 0.0, %v2035
    %2037 = vmatprep.mubr.f32.mxu0 0.0
    %2038 = vmatmul.mubr.f32.gmra.mrb[0].mxu0 %v1879
    %v2039 = vpop.f32.mrb[0].mxu0
    %v2040 = vadd.f32 0.0, %v2039
    %v2041 = vpop.f32.mrb[0].mxu0
    %v2042 = vadd.f32 0.0, %v2041
    %2043 = vmatprep.mubr.f32.mxu0 0.0
    %2044 = vmatmul.mubr.f32.gmra.mrb[0].mxu0 %v1880
    %v2045 = vpop.f32.mrb[0].mxu0
    %v2046 = vadd.f32 0.0, %v2045
    %v2047 = vpop.f32.mrb[0].mxu0
    %v2048 = vadd.f32 0.0, %v2047
    %2049 = vmatprep.mubr.f32.mxu0 0.0
    %2050 = vmatmul.mubr.f32.gmra.mrb[0].mxu0 %v1881
    %v2051 = vpop.f32.mrb[0].mxu0
    %v2052 = vadd.f32 0.0, %v2051
    %v2053 = vpop.f32.mrb[0].mxu0
    %v2054 = vadd.f32 0.0, %v2053
    %2055 = vmatprep.mubr.f32.mxu0 0.0
    %2056 = vmatmul.mubr.f32.gmra.mrb[0].mxu0 %v1882
    %v2057 = vpop.f32.mrb[0].mxu0
    %v2058 = vadd.f32 0.0, %v2057
    %v2059 = vpop.f32.mrb[0].mxu0
    %v2060 = vadd.f32 0.0, %v2059
    %2061 = vmatprep.mubr.f32.mxu0 0.0
    %2062 = vmatmul.mubr.f32.gmra.mrb[0].mxu0 %v1883
    %v2063 = vpop.f32.mrb[0].mxu0
    %v2064 = vadd.f32 0.0, %v2063
    %v2065 = vpop.f32.mrb[0].mxu0
    %v2066 = vadd.f32 0.0, %v2065
    %2067 = vmatprep.mubr.f32.mxu0 0.0
    %2068 = vmatmul.mubr.f32.gmra.mrb[0].mxu0 %v1884
    %v2069 = vpop.f32.mrb[0].mxu0
    %v2070 = vadd.f32 0.0, %v2069
    %v2071 = vpop.f32.mrb[0].mxu0
    %v2072 = vadd.f32 0.0, %v2071
    %2073 = vmatprep.mubr.f32.mxu0 0.0
    %2074 = vmatmul.mubr.f32.gmra.mrb[0].mxu0 %v1885
    %v2075 = vpop.f32.mrb[0].mxu0
    %v2076 = vadd.f32 0.0, %v2075
    %v2077 = vpop.f32.mrb[0].mxu0
    %v2078 = vadd.f32 0.0, %v2077
    %2079 = vmatprep.mubr.f32.mxu0 0.0
    %2080 = vmatmul.mubr.f32.gmra.mrb[0].mxu0 %v1886
    %v2081 = vpop.f32.mrb[0].mxu0
    %v2082 = vadd.f32 0.0, %v2081
    %v2083 = vpop.f32.mrb[0].mxu0
    %v2084 = vadd.f32 0.0, %v2083
    %2085 = vmatprep.mubr.f32.mxu0 0.0
    %2086 = vmatmul.mubr.f32.gmra.mrb[0].mxu0 %v1887
    %v2087 = vpop.f32.mrb[0].mxu0
    %v2088 = vadd.f32 0.0, %v2087
    %v2089 = vpop.f32.mrb[0].mxu0
    %v2090 = vadd.f32 0.0, %v2089
    %2091 = vmatprep.mubr.f32.mxu0 0.0
    %2092 = vmatmul.mubr.f32.gmra.mrb[0].mxu0 %v1888
    %v2093 = vpop.f32.mrb[0].mxu0
    %v2094 = vadd.f32 0.0, %v2093
    %v2095 = vpop.f32.mrb[0].mxu0
    %v2096 = vadd.f32 0.0, %v2095
    %2097 = vdwg.mxu0
    %2098 = vmatprep.subr.mxu0 0.0
    %2099 = vmatpush1.msra.mxu0 %v1891
    %2100 = vmatprep.subr.mxu0 0.0
    %2101 = vmatpush1.msra.mxu0 %v1894
    %2102 = vmatprep.subr.mxu0 0.0
    %2103 = vmatpush1.msra.mxu0 %v1897
    %2104 = vmatprep.subr.mxu0 0.0
    %2105 = vmatpush1.msra.mxu0 %v1900
    %2106 = vmatprep.subr.mxu0 0.0
    %2107 = vmatpush1.msra.mxu0 %v1903
    %2108 = vmatprep.subr.mxu0 0.0
    %2109 = vmatpush1.msra.mxu0 %v1906
    %2110 = vmatprep.subr.mxu0 0.0
    %2111 = vmatpush1.msra.mxu0 %v1909
    %2112 = vmatprep.subr.mxu0 0.0
    %2113 = vmatpush1.msra.mxu0 %v1912
    %2114 = vmatprep.subr.mxu0 0.0
    %2115 = vmatpush1.msra.mxu0 %v1915
    %2116 = vmatprep.subr.mxu0 0.0
    %2117 = vmatpush1.msra.mxu0 %v1918
    %2118 = vmatprep.subr.mxu0 0.0
    %2119 = vmatpush1.msra.mxu0 %v1921
    %2120 = vmatprep.subr.mxu0 0.0
    %2121 = vmatpush1.msra.mxu0 %v1924
    %2122 = vmatprep.subr.mxu0 0.0
    %2123 = vmatpush1.msra.mxu0 %v1927
    %2124 = vmatprep.subr.mxu0 0.0
    %2125 = vmatpush1.msra.mxu0 %v1930
    %2126 = vmatprep.subr.mxu0 0.0
    %2127 = vmatpush1.msra.mxu0 %v1933
    %2128 = vmatprep.subr.mxu0 0.0
    %2129 = vmatpush1.msra.mxu0 %v1936
    %2130 = vmatprep.subr.mxu0 0.0
    %2131 = vmatpush1.msra.mxu0 0.0
    %2132 = vmatprep.subr.mxu0 0.0
    %2133 = vmatpush1.msra.mxu0 0.0
    %2134 = vmatprep.subr.mxu0 0.0
    %2135 = vmatpush1.msra.mxu0 0.0
    %2136 = vmatprep.subr.mxu0 0.0
    %2137 = vmatpush1.msra.mxu0 0.0
    %2138 = vmatprep.subr.mxu0 0.0
    %2139 = vmatpush1.msra.mxu0 0.0
    %2140 = vmatprep.subr.mxu0 0.0
    %2141 = vmatpush1.msra.mxu0 0.0
    %2142 = vmatprep.subr.mxu0 0.0
    %2143 = vmatpush1.msra.mxu0 0.0
    %2144 = vmatprep.subr.mxu0 0.0
    %2145 = vmatpush1.msra.mxu0 0.0
    %2146 = vmatprep.subr.mxu0 0.0
    %2147 = vmatpush1.msra.mxu0 0.0
    %2148 = vmatprep.subr.mxu0 0.0
    %2149 = vmatpush1.msra.mxu0 0.0
    %2150 = vmatprep.subr.mxu0 0.0
    %2151 = vmatpush1.msra.mxu0 0.0
    %2152 = vmatprep.subr.mxu0 0.0
    %2153 = vmatpush1.msra.mxu0 0.0
    %2154 = vmatprep.subr.mxu0 0.0
    %2155 = vmatpush1.msra.mxu0 0.0
    %2156 = vmatprep.subr.mxu0 0.0
    %2157 = vmatpush1.msra.mxu0 0.0
    %2158 = vmatprep.subr.mxu0 0.0
    %2159 = vmatpush1.msra.mxu0 0.0
    %2160 = vmatprep.subr.mxu0 0.0
    %2161 = vmatpush1.msra.mxu0 0.0
    %2162 = vmatprep.mubr.f32.mxu0 0.0
    %2163 = vmatmul.mubr.f32.gmra.mrb[0].mxu0 %v1873
    %v2164 = vpop.f32.mrb[0].mxu0
    %v2165 = vadd.f32 0.0, %v2164
    %v2166 = vpop.f32.mrb[0].mxu0
    %2167 = vmatprep.mubr.f32.mxu0 0.0
    %2168 = vmatmul.mubr.f32.gmra.mrb[0].mxu0 %v1874
    %v2169 = vpop.f32.mrb[0].mxu0
    %v2170 = vadd.f32 0.0, %v2169
    %v2171 = vpop.f32.mrb[0].mxu0
    %2172 = vmatprep.mubr.f32.mxu0 0.0
    %2173 = vmatmul.mubr.f32.gmra.mrb[0].mxu0 %v1875
    %v2174 = vpop.f32.mrb[0].mxu0
    %v2175 = vadd.f32 0.0, %v2174
    %v2176 = vpop.f32.mrb[0].mxu0
    %2177 = vmatprep.mubr.f32.mxu0 0.0
    %2178 = vmatmul.mubr.f32.gmra.mrb[0].mxu0 %v1876
    %v2179 = vpop.f32.mrb[0].mxu0
    %v2180 = vadd.f32 0.0, %v2179
    %v2181 = vpop.f32.mrb[0].mxu0
    %2182 = vmatprep.mubr.f32.mxu0 0.0
    %2183 = vmatmul.mubr.f32.gmra.mrb[0].mxu0 %v1877
    %v2184 = vpop.f32.mrb[0].mxu0
    %v2185 = vadd.f32 0.0, %v2184
    %v2186 = vpop.f32.mrb[0].mxu0
    %2187 = vmatprep.mubr.f32.mxu0 0.0
    %2188 = vmatmul.mubr.f32.gmra.mrb[0].mxu0 %v1878
    %v2189 = vpop.f32.mrb[0].mxu0
    %v2190 = vadd.f32 0.0, %v2189
    %v2191 = vpop.f32.mrb[0].mxu0
    %2192 = vmatprep.mubr.f32.mxu0 0.0
    %2193 = vmatmul.mubr.f32.gmra.mrb[0].mxu0 %v1879
    %v2194 = vpop.f32.mrb[0].mxu0
    %v2195 = vadd.f32 0.0, %v2194
    %v2196 = vpop.f32.mrb[0].mxu0
    %2197 = vmatprep.mubr.f32.mxu0 0.0
    %2198 = vmatmul.mubr.f32.gmra.mrb[0].mxu0 %v1880
    %v2199 = vpop.f32.mrb[0].mxu0
    %v2200 = vadd.f32 0.0, %v2199
    %v2201 = vpop.f32.mrb[0].mxu0
    %2202 = vmatprep.mubr.f32.mxu0 0.0
    %2203 = vmatmul.mubr.f32.gmra.mrb[0].mxu0 %v1881
    %v2204 = vpop.f32.mrb[0].mxu0
    %v2205 = vadd.f32 0.0, %v2204
    %v2206 = vpop.f32.mrb[0].mxu0
    %2207 = vmatprep.mubr.f32.mxu0 0.0
    %2208 = vmatmul.mubr.f32.gmra.mrb[0].mxu0 %v1882
    %v2209 = vpop.f32.mrb[0].mxu0
    %v2210 = vadd.f32 0.0, %v2209
    %v2211 = vpop.f32.mrb[0].mxu0
    %2212 = vmatprep.mubr.f32.mxu0 0.0
    %2213 = vmatmul.mubr.f32.gmra.mrb[0].mxu0 %v1883
    %v2214 = vpop.f32.mrb[0].mxu0
    %v2215 = vadd.f32 0.0, %v2214
    %v2216 = vpop.f32.mrb[0].mxu0
    %2217 = vmatprep.mubr.f32.mxu0 0.0
    %2218 = vmatmul.mubr.f32.gmra.mrb[0].mxu0 %v1884
    %v2219 = vpop.f32.mrb[0].mxu0
    %v2220 = vadd.f32 0.0, %v2219
    %v2221 = vpop.f32.mrb[0].mxu0
    %2222 = vmatprep.mubr.f32.mxu0 0.0
    %2223 = vmatmul.mubr.f32.gmra.mrb[0].mxu0 %v1885
    %v2224 = vpop.f32.mrb[0].mxu0
    %v2225 = vadd.f32 0.0, %v2224
    %v2226 = vpop.f32.mrb[0].mxu0
    %2227 = vmatprep.mubr.f32.mxu0 0.0
    %2228 = vmatmul.mubr.f32.gmra.mrb[0].mxu0 %v1886
    %v2229 = vpop.f32.mrb[0].mxu0
    %v2230 = vadd.f32 0.0, %v2229
    %v2231 = vpop.f32.mrb[0].mxu0
    %2232 = vmatprep.mubr.f32.mxu0 0.0
    %2233 = vmatmul.mubr.f32.gmra.mrb[0].mxu0 %v1887
    %v2234 = vpop.f32.mrb[0].mxu0
    %v2235 = vadd.f32 0.0, %v2234
    %v2236 = vpop.f32.mrb[0].mxu0
    %2237 = vmatprep.mubr.f32.mxu0 0.0
    %2238 = vmatmul.mubr.f32.gmra.mrb[0].mxu0 %v1888
    %v2239 = vpop.f32.mrb[0].mxu0
    %v2240 = vadd.f32 0.0, %v2239
    %v2241 = vpop.f32.mrb[0].mxu0
    %2242 = vdwg.mxu0
    %v2243 = vlaneseq
    %v2244 = vshrl.u32 %v2243, 7
    %v2245 = vsub.s32 6, %v2244
    %v2246 = vrot.slane %v51, %v2245
    %v2247 = vadd.f32 %v2004, %v2246
    %v2248 = vadd.f32 %v2010, %v2246
    %v2249 = vadd.f32 %v2016, %v2246
    %v2250 = vadd.f32 %v2022, %v2246
    %v2251 = vadd.f32 %v2028, %v2246
    %v2252 = vadd.f32 %v2034, %v2246
    %v2253 = vadd.f32 %v2040, %v2246
    %v2254 = vadd.f32 %v2046, %v2246
    %v2255 = vadd.f32 %v2052, %v2246
    %v2256 = vadd.f32 %v2058, %v2246
    %v2257 = vadd.f32 %v2064, %v2246
    %v2258 = vadd.f32 %v2070, %v2246
    %v2259 = vadd.f32 %v2076, %v2246
    %v2260 = vadd.f32 %v2082, %v2246
    %v2261 = vadd.f32 %v2088, %v2246
    %v2262 = vadd.f32 %v2094, %v2246
    %2263 = vxpose.xlu0.b32.start [1/16] %v2165, 128
    %2264 = vxpose.xlu0.b32.cont [2/16] %v2170, 128
    %2265 = vxpose.xlu0.b32.cont [3/16] %v2175, 128
    %2266 = vxpose.xlu0.b32.cont [4/16] %v2180, 128
    %2267 = vxpose.xlu0.b32.cont [5/16] %v2185, 128
    %2268 = vxpose.xlu0.b32.cont [6/16] %v2190, 128
    %2269 = vxpose.xlu0.b32.cont [7/16] %v2195, 128
    %2270 = vxpose.xlu0.b32.cont [8/16] %v2200, 128
    %2271 = vxpose.xlu0.b32.cont [9/16] %v2205, 128
    %2272 = vxpose.xlu0.b32.cont [10/16] %v2210, 128
    %2273 = vxpose.xlu0.b32.cont [11/16] %v2215, 128
    %2274 = vxpose.xlu0.b32.cont [12/16] %v2220, 128
    %2275 = vxpose.xlu0.b32.cont [13/16] %v2225, 128
    %2276 = vxpose.xlu0.b32.cont [14/16] %v2230, 128
    %2277 = vxpose.xlu0.b32.cont [15/16] %v2235, 128
    %2278 = vxpose.xlu0.b32.end [16/16] %v2240, 128
    %v2279 = vpop.trf.xlu0
    %v2280 = vpop.trf.xlu0
    %v2281 = vpop.trf.xlu0
    %v2282 = vpop.trf.xlu0
    %v2283 = vpop.trf.xlu0
    %v2284 = vpop.trf.xlu0
    %v2285 = vpop.trf.xlu0
    %v2286 = vpop.trf.xlu0
    %v2287 = vpop.trf.xlu0
    %v2288 = vpop.trf.xlu0
    %v2289 = vpop.trf.xlu0
    %v2290 = vpop.trf.xlu0
    %v2291 = vpop.trf.xlu0
    %v2292 = vpop.trf.xlu0
    %v2293 = vpop.trf.xlu0
    %v2294 = vpop.trf.xlu0
    %v2295 = vsel %vm667, %v2279, -inf
    %2296 = vmax.xlane.f32.xlu0 %v2295
    %v2297 = vpop.xlane.xlu0 %2296
    %v2298 = vlaneseq
    %v2299 = vshrl.u32 %v2298, 7
    %v2300 = vsub.s32 0, %v2299
    %v2301 = vrot.slane %v2297, %v2300
    %v2302 = vadd.f32 %v2165, %v2301
    %v2303 = vadd.f32 %v2170, %v2301
    %v2304 = vadd.f32 %v2175, %v2301
    %v2305 = vadd.f32 %v2180, %v2301
    %v2306 = vadd.f32 %v2185, %v2301
    %v2307 = vadd.f32 %v2190, %v2301
    %v2308 = vadd.f32 %v2195, %v2301
    %v2309 = vadd.f32 %v2200, %v2301
    %v2310 = vadd.f32 %v2205, %v2301
    %v2311 = vadd.f32 %v2210, %v2301
    %v2312 = vadd.f32 %v2215, %v2301
    %v2313 = vadd.f32 %v2220, %v2301
    %v2314 = vadd.f32 %v2225, %v2301
    %v2315 = vadd.f32 %v2230, %v2301
    %v2316 = vadd.f32 %v2235, %v2301
    %v2317 = vadd.f32 %v2240, %v2301
    %v2318 = vmul.f32 %v2302, 0.2
    %v2319 = vmul.f32 %v2303, 0.2
    %v2320 = vmul.f32 %v2304, 0.2
    %v2321 = vmul.f32 %v2305, 0.2
    %v2322 = vmul.f32 %v2306, 0.2
    %v2323 = vmul.f32 %v2307, 0.2
    %v2324 = vmul.f32 %v2308, 0.2
    %v2325 = vmul.f32 %v2309, 0.2
    %v2326 = vmul.f32 %v2310, 0.2
    %v2327 = vmul.f32 %v2311, 0.2
    %v2328 = vmul.f32 %v2312, 0.2
    %v2329 = vmul.f32 %v2313, 0.2
    %v2330 = vmul.f32 %v2314, 0.2
    %v2331 = vmul.f32 %v2315, 0.2
    %v2332 = vmul.f32 %v2316, 0.2
    %v2333 = vmul.f32 %v2317, 0.2
    %v2334 = vmax.f32 %v2302, %v2318
    %v2335 = vmax.f32 %v2303, %v2319
    %v2336 = vmax.f32 %v2304, %v2320
    %v2337 = vmax.f32 %v2305, %v2321
    %v2338 = vmax.f32 %v2306, %v2322
    %v2339 = vmax.f32 %v2307, %v2323
    %v2340 = vmax.f32 %v2308, %v2324
    %v2341 = vmax.f32 %v2309, %v2325
    %v2342 = vmax.f32 %v2310, %v2326
    %v2343 = vmax.f32 %v2311, %v2327
    %v2344 = vmax.f32 %v2312, %v2328
    %v2345 = vmax.f32 %v2313, %v2329
    %v2346 = vmax.f32 %v2314, %v2330
    %v2347 = vmax.f32 %v2315, %v2331
    %v2348 = vmax.f32 %v2316, %v2332
    %v2349 = vmax.f32 %v2317, %v2333
    %2351 = vset.pattern.permute.xlu0 1
    %2352 = vperm.xlu0 %2351, %v2165
    %v2353 = vpop.permute.xlu0 %2352
    %2356 = vset.pattern.permute.xlu0 1
    %2357 = vperm.xlu0 %2356, %v2170
    %v2358 = vpop.permute.xlu0 %2357
    %2361 = vset.pattern.permute.xlu0 1
    %2362 = vperm.xlu0 %2361, %v2175
    %v2363 = vpop.permute.xlu0 %2362
    %2366 = vset.pattern.permute.xlu0 1
    %2367 = vperm.xlu0 %2366, %v2180
    %v2368 = vpop.permute.xlu0 %2367
    %2371 = vset.pattern.permute.xlu0 1
    %2372 = vperm.xlu0 %2371, %v2185
    %v2373 = vpop.permute.xlu0 %2372
    %2376 = vset.pattern.permute.xlu0 1
    %2377 = vperm.xlu0 %2376, %v2190
    %v2378 = vpop.permute.xlu0 %2377
    %2381 = vset.pattern.permute.xlu0 1
    %2382 = vperm.xlu0 %2381, %v2195
    %v2383 = vpop.permute.xlu0 %2382
    %2386 = vset.pattern.permute.xlu0 1
    %2387 = vperm.xlu0 %2386, %v2200
    %v2388 = vpop.permute.xlu0 %2387
    %2391 = vset.pattern.permute.xlu0 1
    %2392 = vperm.xlu0 %2391, %v2205
    %v2393 = vpop.permute.xlu0 %2392
    %2396 = vset.pattern.permute.xlu0 1
    %2397 = vperm.xlu0 %2396, %v2210
    %v2398 = vpop.permute.xlu0 %2397
    %2401 = vset.pattern.permute.xlu0 1
    %2402 = vperm.xlu0 %2401, %v2215
    %v2403 = vpop.permute.xlu0 %2402
    %2406 = vset.pattern.permute.xlu0 1
    %2407 = vperm.xlu0 %2406, %v2220
    %v2408 = vpop.permute.xlu0 %2407
    %2411 = vset.pattern.permute.xlu0 1
    %2412 = vperm.xlu0 %2411, %v2225
    %v2413 = vpop.permute.xlu0 %2412
    %2416 = vset.pattern.permute.xlu0 1
    %2417 = vperm.xlu0 %2416, %v2230
    %v2418 = vpop.permute.xlu0 %2417
    %2421 = vset.pattern.permute.xlu0 1
    %2422 = vperm.xlu0 %2421, %v2235
    %v2423 = vpop.permute.xlu0 %2422
    %2426 = vset.pattern.permute.xlu0 1
    %2427 = vperm.xlu0 %2426, %v2240
    %v2428 = vpop.permute.xlu0 %2427
    %v2430 = vlaneseq
    %v2431 = vshrl.u32 %v2430, 7
    %v2432 = vsub.s32 0, %v2431
    %v2433 = vrot.slane %v2279, %v2432
    %v2434 = vadd.f32 %v2353, %v2433
    %v2435 = vadd.f32 %v2358, %v2433
    %v2436 = vadd.f32 %v2363, %v2433
    %v2437 = vadd.f32 %v2368, %v2433
    %v2438 = vadd.f32 %v2373, %v2433
    %v2439 = vadd.f32 %v2378, %v2433
    %v2440 = vadd.f32 %v2383, %v2433
    %v2441 = vadd.f32 %v2388, %v2433
    %v2442 = vadd.f32 %v2393, %v2433
    %v2443 = vadd.f32 %v2398, %v2433
    %v2444 = vadd.f32 %v2403, %v2433
    %v2445 = vadd.f32 %v2408, %v2433
    %v2446 = vadd.f32 %v2413, %v2433
    %v2447 = vadd.f32 %v2418, %v2433
    %v2448 = vadd.f32 %v2423, %v2433
    %v2449 = vadd.f32 %v2428, %v2433
    %v2450 = vmul.f32 %v2434, 0.2
    %v2451 = vmul.f32 %v2435, 0.2
    %v2452 = vmul.f32 %v2436, 0.2
    %v2453 = vmul.f32 %v2437, 0.2
    %v2454 = vmul.f32 %v2438, 0.2
    %v2455 = vmul.f32 %v2439, 0.2
    %v2456 = vmul.f32 %v2440, 0.2
    %v2457 = vmul.f32 %v2441, 0.2
    %v2458 = vmul.f32 %v2442, 0.2
    %v2459 = vmul.f32 %v2443, 0.2
    %v2460 = vmul.f32 %v2444, 0.2
    %v2461 = vmul.f32 %v2445, 0.2
    %v2462 = vmul.f32 %v2446, 0.2
    %v2463 = vmul.f32 %v2447, 0.2
    %v2464 = vmul.f32 %v2448, 0.2
    %v2465 = vmul.f32 %v2449, 0.2
    %v2466 = vmax.f32 %v2434, %v2450
    %v2467 = vmax.f32 %v2435, %v2451
    %v2468 = vmax.f32 %v2436, %v2452
    %v2469 = vmax.f32 %v2437, %v2453
    %v2470 = vmax.f32 %v2438, %v2454
    %v2471 = vmax.f32 %v2439, %v2455
    %v2472 = vmax.f32 %v2440, %v2456
    %v2473 = vmax.f32 %v2441, %v2457
    %v2474 = vmax.f32 %v2442, %v2458
    %v2475 = vmax.f32 %v2443, %v2459
    %v2476 = vmax.f32 %v2444, %v2460
    %v2477 = vmax.f32 %v2445, %v2461
    %v2478 = vmax.f32 %v2446, %v2462
    %v2479 = vmax.f32 %v2447, %v2463
    %v2480 = vmax.f32 %v2448, %v2464
    %v2481 = vmax.f32 %v2449, %v2465
    %2483 = vset.pattern.permute.xlu0 1
    %2484 = vperm.xlu0 %2483, %v2334
    %v2485 = vpop.permute.xlu0 %2484
    %2488 = vset.pattern.permute.xlu0 1
    %2489 = vperm.xlu0 %2488, %v2335
    %v2490 = vpop.permute.xlu0 %2489
    %2493 = vset.pattern.permute.xlu0 1
    %2494 = vperm.xlu0 %2493, %v2336
    %v2495 = vpop.permute.xlu0 %2494
    %2498 = vset.pattern.permute.xlu0 1
    %2499 = vperm.xlu0 %2498, %v2337
    %v2500 = vpop.permute.xlu0 %2499
    %2503 = vset.pattern.permute.xlu0 1
    %2504 = vperm.xlu0 %2503, %v2338
    %v2505 = vpop.permute.xlu0 %2504
    %2508 = vset.pattern.permute.xlu0 1
    %2509 = vperm.xlu0 %2508, %v2339
    %v2510 = vpop.permute.xlu0 %2509
    %2513 = vset.pattern.permute.xlu0 1
    %2514 = vperm.xlu0 %2513, %v2340
    %v2515 = vpop.permute.xlu0 %2514
    %2518 = vset.pattern.permute.xlu0 1
    %2519 = vperm.xlu0 %2518, %v2341
    %v2520 = vpop.permute.xlu0 %2519
    %2523 = vset.pattern.permute.xlu0 1
    %2524 = vperm.xlu0 %2523, %v2342
    %v2525 = vpop.permute.xlu0 %2524
    %2528 = vset.pattern.permute.xlu0 1
    %2529 = vperm.xlu0 %2528, %v2343
    %v2530 = vpop.permute.xlu0 %2529
    %2533 = vset.pattern.permute.xlu0 1
    %2534 = vperm.xlu0 %2533, %v2344
    %v2535 = vpop.permute.xlu0 %2534
    %2538 = vset.pattern.permute.xlu0 1
    %2539 = vperm.xlu0 %2538, %v2345
    %v2540 = vpop.permute.xlu0 %2539
    %2543 = vset.pattern.permute.xlu0 1
    %2544 = vperm.xlu0 %2543, %v2346
    %v2545 = vpop.permute.xlu0 %2544
    %2548 = vset.pattern.permute.xlu0 1
    %2549 = vperm.xlu0 %2548, %v2347
    %v2550 = vpop.permute.xlu0 %2549
    %2553 = vset.pattern.permute.xlu0 1
    %2554 = vperm.xlu0 %2553, %v2348
    %v2555 = vpop.permute.xlu0 %2554
    %2558 = vset.pattern.permute.xlu0 1
    %2559 = vperm.xlu0 %2558, %v2349
    %v2560 = vpop.permute.xlu0 %2559
    %v2562 = vsub.f32 %v2466, %v2485
    %v2563 = vsub.f32 %v2467, %v2490
    %v2564 = vsub.f32 %v2468, %v2495
    %v2565 = vsub.f32 %v2469, %v2500
    %v2566 = vsub.f32 %v2470, %v2505
    %v2567 = vsub.f32 %v2471, %v2510
    %v2568 = vsub.f32 %v2472, %v2515
    %v2569 = vsub.f32 %v2473, %v2520
    %v2570 = vsub.f32 %v2474, %v2525
    %v2571 = vsub.f32 %v2475, %v2530
    %v2572 = vsub.f32 %v2476, %v2535
    %v2573 = vsub.f32 %v2477, %v2540
    %v2574 = vsub.f32 %v2478, %v2545
    %v2575 = vsub.f32 %v2479, %v2550
    %v2576 = vsub.f32 %v2480, %v2555
    %v2577 = vsub.f32 %v2481, %v2560
    %v2578 = vmul.f32 %v2562, 1.442695
    %v2579 = vpow.pop %v2578
    %v2580 = vmul.f32 %v2563, 1.442695
    %v2581 = vpow.pop %v2580
    %v2582 = vmul.f32 %v2564, 1.442695
    %v2583 = vpow.pop %v2582
    %v2584 = vmul.f32 %v2565, 1.442695
    %v2585 = vpow.pop %v2584
    %v2586 = vmul.f32 %v2566, 1.442695
    %v2587 = vpow.pop %v2586
    %v2588 = vmul.f32 %v2567, 1.442695
    %v2589 = vpow.pop %v2588
    %v2590 = vmul.f32 %v2568, 1.442695
    %v2591 = vpow.pop %v2590
    %v2592 = vmul.f32 %v2569, 1.442695
    %v2593 = vpow.pop %v2592
    %v2594 = vmul.f32 %v2570, 1.442695
    %v2595 = vpow.pop %v2594
    %v2596 = vmul.f32 %v2571, 1.442695
    %v2597 = vpow.pop %v2596
    %v2598 = vmul.f32 %v2572, 1.442695
    %v2599 = vpow.pop %v2598
    %v2600 = vmul.f32 %v2573, 1.442695
    %v2601 = vpow.pop %v2600
    %v2602 = vmul.f32 %v2574, 1.442695
    %v2603 = vpow.pop %v2602
    %v2604 = vmul.f32 %v2575, 1.442695
    %v2605 = vpow.pop %v2604
    %v2606 = vmul.f32 %v2576, 1.442695
    %v2607 = vpow.pop %v2606
    %v2608 = vmul.f32 %v2577, 1.442695
    %v2609 = vpow.pop %v2608
    %v2610 = vmul.f32 %v2579, %v983
    %v2611 = vmul.f32 %v2581, %v984
    %v2612 = vmul.f32 %v2583, %v985
    %v2613 = vmul.f32 %v2585, %v986
    %v2614 = vmul.f32 %v2587, %v987
    %v2615 = vmul.f32 %v2589, %v988
    %v2616 = vmul.f32 %v2591, %v989
    %v2617 = vmul.f32 %v2593, %v990
    %v2618 = vmul.f32 %v2595, %v991
    %v2619 = vmul.f32 %v2597, %v992
    %v2620 = vmul.f32 %v2599, %v993
    %v2621 = vmul.f32 %v2601, %v994
    %v2622 = vmul.f32 %v2603, %v995
    %v2623 = vmul.f32 %v2605, %v996
    %v2624 = vmul.f32 %v2607, %v997
    %v2625 = vmul.f32 %v2609, %v998
    %2626 = vadd.xlane.f32.xlu0 %v2610
    %v2627 = vpop.xlane.xlu0 %2626
    %2628 = vadd.xlane.f32.xlu0 %v2611
    %v2629 = vpop.xlane.xlu0 %2628
    %2630 = vadd.xlane.f32.xlu0 %v2612
    %v2631 = vpop.xlane.xlu0 %2630
    %2632 = vadd.xlane.f32.xlu0 %v2613
    %v2633 = vpop.xlane.xlu0 %2632
    %2634 = vadd.xlane.f32.xlu0 %v2614
    %v2635 = vpop.xlane.xlu0 %2634
    %2636 = vadd.xlane.f32.xlu0 %v2615
    %v2637 = vpop.xlane.xlu0 %2636
    %2638 = vadd.xlane.f32.xlu0 %v2616
    %v2639 = vpop.xlane.xlu0 %2638
    %2640 = vadd.xlane.f32.xlu0 %v2617
    %v2641 = vpop.xlane.xlu0 %2640
    %2642 = vadd.xlane.f32.xlu0 %v2618
    %v2643 = vpop.xlane.xlu0 %2642
    %2644 = vadd.xlane.f32.xlu0 %v2619
    %v2645 = vpop.xlane.xlu0 %2644
    %2646 = vadd.xlane.f32.xlu0 %v2620
    %v2647 = vpop.xlane.xlu0 %2646
    %2648 = vadd.xlane.f32.xlu0 %v2621
    %v2649 = vpop.xlane.xlu0 %2648
    %2650 = vadd.xlane.f32.xlu0 %v2622
    %v2651 = vpop.xlane.xlu0 %2650
    %2652 = vadd.xlane.f32.xlu0 %v2623
    %v2653 = vpop.xlane.xlu0 %2652
    %2654 = vadd.xlane.f32.xlu0 %v2624
    %v2655 = vpop.xlane.xlu0 %2654
    %2656 = vadd.xlane.f32.xlu0 %v2625
    %v2657 = vpop.xlane.xlu0 %2656
    %v2658 = vpack.c.bf16 %v2611, %v2610
    %v2659 = vpack.c.bf16 %v2613, %v2612
    %v2660 = vpack.c.bf16 %v2615, %v2614
    %v2661 = vpack.c.bf16 %v2617, %v2616
    %v2662 = vpack.c.bf16 %v2619, %v2618
    %v2663 = vpack.c.bf16 %v2621, %v2620
    %v2664 = vpack.c.bf16 %v2623, %v2622
    %v2665 = vpack.c.bf16 %v2625, %v2624
    %v2666 = vpack.c.bf16 %v2012, %v2006
    %v2667 = vpack.c.bf16 %v2024, %v2018
    %v2668 = vpack.c.bf16 %v2036, %v2030
    %v2669 = vpack.c.bf16 %v2048, %v2042
    %v2670 = vpack.c.bf16 %v2060, %v2054
    %v2671 = vpack.c.bf16 %v2072, %v2066
    %v2672 = vpack.c.bf16 %v2084, %v2078
    %v2673 = vpack.c.bf16 %v2096, %v2090
    %2674 = vmatprep.subr.bf16.mxu0 0
    %2675 = vmatpush1.bf16.msra.mxu0 %v2666
    %2676 = vmatprep.subr.bf16.mxu0 0
    %2677 = vmatpush1.bf16.msra.mxu0 %v2667
    %2678 = vmatprep.subr.bf16.mxu0 0
    %2679 = vmatpush1.bf16.msra.mxu0 %v2668
    %2680 = vmatprep.subr.bf16.mxu0 0
    %2681 = vmatpush1.bf16.msra.mxu0 %v2669
    %2682 = vmatprep.subr.bf16.mxu0 0
    %2683 = vmatpush1.bf16.msra.mxu0 %v2670
    %2684 = vmatprep.subr.bf16.mxu0 0
    %2685 = vmatpush1.bf16.msra.mxu0 %v2671
    %2686 = vmatprep.subr.bf16.mxu0 0
    %2687 = vmatpush1.bf16.msra.mxu0 %v2672
    %2688 = vmatprep.subr.bf16.mxu0 0
    %2689 = vmatpush1.bf16.msra.mxu0 %v2673
    %2690 = vmatprep.subr.bf16.mxu0 0
    %2691 = vmatpush1.bf16.msra.mxu0 0
    %2692 = vmatprep.subr.bf16.mxu0 0
    %2693 = vmatpush1.bf16.msra.mxu0 0
    %2694 = vmatprep.subr.bf16.mxu0 0
    %2695 = vmatpush1.bf16.msra.mxu0 0
    %2696 = vmatprep.subr.bf16.mxu0 0
    %2697 = vmatpush1.bf16.msra.mxu0 0
    %2698 = vmatprep.subr.bf16.mxu0 0
    %2699 = vmatpush1.bf16.msra.mxu0 0
    %2700 = vmatprep.subr.bf16.mxu0 0
    %2701 = vmatpush1.bf16.msra.mxu0 0
    %2702 = vmatprep.subr.bf16.mxu0 0
    %2703 = vmatpush1.bf16.msra.mxu0 0
    %2704 = vmatprep.subr.bf16.mxu0 0
    %2705 = vmatpush1.bf16.msra.mxu0 0
    %2706 = vmatprep.mubr.bf16.mxu0 0
    %2707 = vmatmul.mubr.bf16.gmra.mrb[0].mxu0 %v2658
    %v2708 = vpop.f32.mrb[0].mxu0
    %v2709 = vadd.f32 0.0, %v2708
    %v2710 = vpop.f32.mrb[0].mxu0
    %v2711 = vpop.f32.mrb[0].mxu0
    %v2712 = vadd.f32 0.0, %v2711
    %v2713 = vpop.f32.mrb[0].mxu0
    %2714 = vmatprep.mubr.bf16.mxu0 0
    %2715 = vmatmul.mubr.bf16.gmra.mrb[0].mxu0 %v2659
    %v2716 = vpop.f32.mrb[0].mxu0
    %v2717 = vadd.f32 0.0, %v2716
    %v2718 = vpop.f32.mrb[0].mxu0
    %v2719 = vpop.f32.mrb[0].mxu0
    %v2720 = vadd.f32 0.0, %v2719
    %v2721 = vpop.f32.mrb[0].mxu0
    %2722 = vmatprep.mubr.bf16.mxu0 0
    %2723 = vmatmul.mubr.bf16.gmra.mrb[0].mxu0 %v2660
    %v2724 = vpop.f32.mrb[0].mxu0
    %v2725 = vadd.f32 0.0, %v2724
    %v2726 = vpop.f32.mrb[0].mxu0
    %v2727 = vpop.f32.mrb[0].mxu0
    %v2728 = vadd.f32 0.0, %v2727
    %v2729 = vpop.f32.mrb[0].mxu0
    %2730 = vmatprep.mubr.bf16.mxu0 0
    %2731 = vmatmul.mubr.bf16.gmra.mrb[0].mxu0 %v2661
    %v2732 = vpop.f32.mrb[0].mxu0
    %v2733 = vadd.f32 0.0, %v2732
    %v2734 = vpop.f32.mrb[0].mxu0
    %v2735 = vpop.f32.mrb[0].mxu0
    %v2736 = vadd.f32 0.0, %v2735
    %v2737 = vpop.f32.mrb[0].mxu0
    %2738 = vmatprep.mubr.bf16.mxu0 0
    %2739 = vmatmul.mubr.bf16.gmra.mrb[0].mxu0 %v2662
    %v2740 = vpop.f32.mrb[0].mxu0
    %v2741 = vadd.f32 0.0, %v2740
    %v2742 = vpop.f32.mrb[0].mxu0
    %v2743 = vpop.f32.mrb[0].mxu0
    %v2744 = vadd.f32 0.0, %v2743
    %v2745 = vpop.f32.mrb[0].mxu0
    %2746 = vmatprep.mubr.bf16.mxu0 0
    %2747 = vmatmul.mubr.bf16.gmra.mrb[0].mxu0 %v2663
    %v2748 = vpop.f32.mrb[0].mxu0
    %v2749 = vadd.f32 0.0, %v2748
    %v2750 = vpop.f32.mrb[0].mxu0
    %v2751 = vpop.f32.mrb[0].mxu0
    %v2752 = vadd.f32 0.0, %v2751
    %v2753 = vpop.f32.mrb[0].mxu0
    %2754 = vmatprep.mubr.bf16.mxu0 0
    %2755 = vmatmul.mubr.bf16.gmra.mrb[0].mxu0 %v2664
    %v2756 = vpop.f32.mrb[0].mxu0
    %v2757 = vadd.f32 0.0, %v2756
    %v2758 = vpop.f32.mrb[0].mxu0
    %v2759 = vpop.f32.mrb[0].mxu0
    %v2760 = vadd.f32 0.0, %v2759
    %v2761 = vpop.f32.mrb[0].mxu0
    %2762 = vmatprep.mubr.bf16.mxu0 0
    %2763 = vmatmul.mubr.bf16.gmra.mrb[0].mxu0 %v2665
    %v2764 = vpop.f32.mrb[0].mxu0
    %v2765 = vadd.f32 0.0, %v2764
    %v2766 = vpop.f32.mrb[0].mxu0
    %v2767 = vpop.f32.mrb[0].mxu0
    %v2768 = vadd.f32 0.0, %v2767
    %v2769 = vpop.f32.mrb[0].mxu0
    %2770 = vdwg.mxu0
    %v2771 = vrcp.pop %v2627
    %v2772 = vrcp.pop %v2629
    %v2773 = vrcp.pop %v2631
    %v2774 = vrcp.pop %v2633
    %v2775 = vrcp.pop %v2635
    %v2776 = vrcp.pop %v2637
    %v2777 = vrcp.pop %v2639
    %v2778 = vrcp.pop %v2641
    %v2779 = vrcp.pop %v2643
    %v2780 = vrcp.pop %v2645
    %v2781 = vrcp.pop %v2647
    %v2782 = vrcp.pop %v2649
    %v2783 = vrcp.pop %v2651
    %v2784 = vrcp.pop %v2653
    %v2785 = vrcp.pop %v2655
    %v2786 = vrcp.pop %v2657
    %v2787 = vmul.f32 %v2709, %v2771
    %v2788 = vmul.f32 %v2712, %v2772
    %v2789 = vmul.f32 %v2717, %v2773
    %v2790 = vmul.f32 %v2720, %v2774
    %v2791 = vmul.f32 %v2725, %v2775
    %v2792 = vmul.f32 %v2728, %v2776
    %v2793 = vmul.f32 %v2733, %v2777
    %v2794 = vmul.f32 %v2736, %v2778
    %v2795 = vmul.f32 %v2741, %v2779
    %v2796 = vmul.f32 %v2744, %v2780
    %v2797 = vmul.f32 %v2749, %v2781
    %v2798 = vmul.f32 %v2752, %v2782
    %v2799 = vmul.f32 %v2757, %v2783
    %v2800 = vmul.f32 %v2760, %v2784
    %v2801 = vmul.f32 %v2765, %v2785
    %v2802 = vmul.f32 %v2768, %v2786
    %v2803 = vadd.f32 %v2247, %v2787
    %v2804 = vadd.f32 %v2248, %v2788
    %v2805 = vadd.f32 %v2249, %v2789
    %v2806 = vadd.f32 %v2250, %v2790
    %v2807 = vadd.f32 %v2251, %v2791
    %v2808 = vadd.f32 %v2252, %v2792
    %v2809 = vadd.f32 %v2253, %v2793
    %v2810 = vadd.f32 %v2254, %v2794
    %v2811 = vadd.f32 %v2255, %v2795
    %v2812 = vadd.f32 %v2256, %v2796
    %v2813 = vadd.f32 %v2257, %v2797
    %v2814 = vadd.f32 %v2258, %v2798
    %v2815 = vadd.f32 %v2259, %v2799
    %v2816 = vadd.f32 %v2260, %v2800
    %v2817 = vadd.f32 %v2261, %v2801
    %v2818 = vadd.f32 %v2262, %v2802
    %v2819 = vlaneseq
    %v2820 = vshrl.u32 %v2819, 7
    %v2821 = vsub.s32 7, %v2820
    %v2822 = vrot.slane %v51, %v2821
    %v2823 = vadd.f32 %v2803, %v2822
    %v2824 = vadd.f32 %v2804, %v2822
    %v2825 = vadd.f32 %v2805, %v2822
    %v2826 = vadd.f32 %v2806, %v2822
    %v2827 = vadd.f32 %v2807, %v2822
    %v2828 = vadd.f32 %v2808, %v2822
    %v2829 = vadd.f32 %v2809, %v2822
    %v2830 = vadd.f32 %v2810, %v2822
    %v2831 = vadd.f32 %v2811, %v2822
    %v2832 = vadd.f32 %v2812, %v2822
    %v2833 = vadd.f32 %v2813, %v2822
    %v2834 = vadd.f32 %v2814, %v2822
    %v2835 = vadd.f32 %v2815, %v2822
    %v2836 = vadd.f32 %v2816, %v2822
    %v2837 = vadd.f32 %v2817, %v2822
    %v2838 = vadd.f32 %v2818, %v2822
    %v2839 = vmax.f32 %v2823, 0.0
    %v2840 = vmax.f32 %v2824, 0.0
    %v2841 = vmax.f32 %v2825, 0.0
    %v2842 = vmax.f32 %v2826, 0.0
    %v2843 = vmax.f32 %v2827, 0.0
    %v2844 = vmax.f32 %v2828, 0.0
    %v2845 = vmax.f32 %v2829, 0.0
    %v2846 = vmax.f32 %v2830, 0.0
    %v2847 = vmax.f32 %v2831, 0.0
    %v2848 = vmax.f32 %v2832, 0.0
    %v2849 = vmax.f32 %v2833, 0.0
    %v2850 = vmax.f32 %v2834, 0.0
    %v2851 = vmax.f32 %v2835, 0.0
    %v2852 = vmax.f32 %v2836, 0.0
    %v2853 = vmax.f32 %v2837, 0.0
    %v2854 = vmax.f32 %v2838, 0.0
    %2855 = vst [vmem:[%s5] sm:$0xff] %v2839
    %2856 = vst [vmem:[%s5 + $0x8] sm:$0xff] %v2840
    %2857 = vst [vmem:[%s5 + $0x10] sm:$0xff] %v2841
    %2858 = vst [vmem:[%s5 + $0x18] sm:$0xff] %v2842
    %2859 = vst [vmem:[%s5 + $0x20] sm:$0xff] %v2843
    %2860 = vst [vmem:[%s5 + $0x28] sm:$0xff] %v2844
    %2861 = vst [vmem:[%s5 + $0x30] sm:$0xff] %v2845
    %2862 = vst [vmem:[%s5 + $0x38] sm:$0xff] %v2846
    %2863 = vst [vmem:[%s5 + $0x40] sm:$0xff] %v2847
    %2864 = vst [vmem:[%s5 + $0x48] sm:$0xff] %v2848
    %2865 = vst [vmem:[%s5 + $0x50] sm:$0xff] %v2849
    %2866 = vst [vmem:[%s5 + $0x58] sm:$0xff] %v2850
    %2867 = vst [vmem:[%s5 + $0x60] sm:$0xff] %v2851
    %2868 = vst [vmem:[%s5 + $0x68] sm:$0xff] %v2852
    %2869 = vst [vmem:[%s5 + $0x70] sm:$0xff] %v2853
    %2870 = vst [vmem:[%s5 + $0x78] sm:$0xff] %v2854
    // Predicated region
    $region26: #{net_forward.1} parent=1 // pred_check
      _
    $region27: #{net_forward.1} parent=1 // pred_check_branch
      %2872 = sbr.rel (0) target = $region29
    $region28: #{net_forward.1} parent=1 // pred_region
      _
    $region29: #{net_forward.1} parent=1 // pred_fallthru
      _
    // Predicated region
    $region30: #{net_forward.1} parent=1 // pred_check
      _
    $region31: #{net_forward.1} parent=1 // pred_check_branch
      %2874 = sbr.rel (0) target = $region33
    $region32: #{net_forward.1} parent=1 // pred_region
      _
    $region33: #{net_forward.1} parent=1 // pred_fallthru
      _
    %2875 = vsyncpa [#allocation3], 1

</llo_original>
